<compile_context>
chip_gen: v6e
topology: v6e:2x2x1
jax: 0.10.0
libtpu: 0.0.40
codegen_flags: <defaults>
</compile_context>

<pallas_src>
import numpy as np

import jax
import jax.numpy as jnp
from jax.experimental import pallas as pl
from jax.experimental.pallas import tpu as pltpu


# ------------------------- static model dimensions -------------------------
N_BATCH = 2
CIN, H, W = 4, 16, 16            # input (C, H, W)
K = 5                            # conv kernel size (both convs), stride 1, VALID
C1 = 8                           # conv1 out channels
C2 = 8                           # conv2 out channels
OH1, OW1 = H - K + 1, W - K + 1          # 12, 12
OH2, OW2 = OH1 - K + 1, OW1 - K + 1      # 8, 8
FLAT = C2 * OH2 * OW2                    # 512 (torch.flatten of NCHW conv output)
HID = 32
S_L, S_R = 8, 8
S_LR = S_L + S_R

# lane-padded widths (multiples of 128 so every concat/reshape is lane-aligned
# and every elementwise op works on full, unmasked vregs).
LIN = 128                  # input row lanes   (actual W*CIN  = 64)
L1 = 128                   # conv1 out lanes   (actual OW1*C1 = 96)
L2 = 128                   # conv2 out lanes   (actual OW2*C2 = 64)
KWC1 = K * LIN             # 640  conv1 contraction depth
KWC2 = K * L1              # 640  conv2 contraction depth

# row indices inside the packed "misc" operand (split weights + all biases)
ROW_B1 = HID               # conv1 bias row
ROW_B2 = HID + 1           # conv2 bias row
ROW_BLIN = HID + 2         # linear bias row
ROW_BLR = HID + 3          # merged split bias row
MISC_ROWS = HID + 4        # 36


# ----------------------------------------------------------------------------
# Single fused kernel.  Layouts (all f32, everything resident in VMEM):
#   x_ref    : (N, H, 128)        rows = (n, h), lanes = (w, cin) zero-padded
#   wc_ref   : (1280, 128)        rows [0:640)  = conv1 kh-stacked Toeplitz
#                                 rows [640:1280) = conv2 kh-stacked Toeplitz
#   wh_ref   : (1024, 32)         linear weight, permuted + lane-padded
#   misc_ref : (36, 128)          rows [0:32) = merged (left|right) weights,
#                                 rows 32..35 = conv1/conv2/linear/split biases
#   ol_ref   : (N, 8)   left head output
#   or_ref   : (N, 8)   right head output
# ----------------------------------------------------------------------------
def _fused_forward_kernel(x_ref, wc_ref, wh_ref, misc_ref, ol_ref, or_ref):
    n = x_ref.shape[0]

    # ---- conv1 as ONE matmul: (n*OH1, K*128) @ (K*128, 128) -----------------
    # LHS columns are the K row-shifted windows, 128-aligned concat of ref loads.
    xw = jnp.concatenate(
        [x_ref[:, kh:kh + OH1, :].reshape(n * OH1, LIN) for kh in range(K)],
        axis=-1)                                               # (n*OH1, 640)
    acc1 = jnp.dot(xw, wc_ref[0:KWC1, :], preferred_element_type=jnp.float32)
    a1 = jnp.maximum(acc1 + misc_ref[ROW_B1:ROW_B1 + 1, :], 0.0)  # (n*OH1, 128)
    a1 = a1.reshape(n, OH1, L1)

    # ---- conv2 as ONE matmul: (n*OH2, K*128) @ (K*128, 128) -----------------
    aw = jnp.concatenate(
        [a1[:, kh:kh + OH2, :].reshape(n * OH2, L1) for kh in range(K)],
        axis=-1)                                               # (n*OH2, 640)
    acc2 = jnp.dot(aw, wc_ref[KWC1:KWC1 + KWC2, :],
                   preferred_element_type=jnp.float32)
    a2 = jnp.maximum(acc2 + misc_ref[ROW_B2:ROW_B2 + 1, :], 0.0)  # (n*OH2, 128)

    # ---- linear 512->32 as ONE matmul over the flattened activation ---------
    a2f = a2.reshape(n, OH2 * L2)                              # (n, 1024), pads are 0
    h = jnp.dot(a2f, wh_ref[...], preferred_element_type=jnp.float32)
    h = jnp.maximum(h + misc_ref[ROW_BLIN:ROW_BLIN + 1, 0:HID], 0.0)  # (n, 32)

    # ---- merged (left | right) heads, identity output activation ------------
    out = jnp.dot(h, misc_ref[0:HID, 0:S_LR],
                  preferred_element_type=jnp.float32)
    out = out + misc_ref[ROW_BLR:ROW_BLR + 1, 0:S_LR]          # (n, 16)
    ol_ref[...] = out[:, :S_L].astype(ol_ref.dtype)
    or_ref[...] = out[:, S_L:].astype(or_ref.dtype)


# ----------------------------------------------------------------------------
# One-time (host-side, numpy) parameter packing — not per-forward XLA ops.
# ----------------------------------------------------------------------------
def prepare_params(params):
    (w1, b1, w2, b2, wlin, blin, wl, bl, wr, br) = [np.asarray(p, np.float32)
                                                    for p in params]

    # conv1, kh-stacked block-Toeplitz along width:
    #   wc1[kh*128 + w*CIN + cin, ow*C1 + c1] = w1[c1, cin, kh, w-ow]
    wc1 = np.zeros((KWC1, L1), np.float32)
    for kh in range(K):
        for ow in range(OW1):
            for kw in range(K):
                w = ow + kw
                wc1[kh * LIN + w * CIN:kh * LIN + (w + 1) * CIN,
                    ow * C1:(ow + 1) * C1] = w1[:, :, kh, kw].T

    # conv2, kh-stacked block-Toeplitz along width:
    #   wc2[kh*128 + w*C1 + c1, ow*C2 + c2] = w2[c2, c1, kh, w-ow]
    wc2 = np.zeros((KWC2, L2), np.float32)
    for kh in range(K):
        for ow in range(OW2):
            for kw in range(K):
                w = ow + kw
                wc2[kh * L1 + w * C1:kh * L1 + (w + 1) * C1,
                    ow * C2:(ow + 1) * C2] = w2[:, :, kh, kw].T

    wc = np.concatenate([wc1, wc2], axis=0)                    # (1280, 128)

    # Wlin (32, 512) permuted so its rows consume the kernel's (oh2, 128-lane)
    # activation layout (lanes = ow2*C2 + c2, padded), instead of torch's NCHW
    # flatten order.  Zero rows at the padded lane positions.
    wlin4 = wlin.reshape(HID, C2, OH2, OW2)                    # [j, c2, oh2, ow2]
    wh_core = np.transpose(wlin4, (2, 3, 1, 0)).reshape(OH2, OW2 * C2, HID)
    wh = np.zeros((OH2, L2, HID), np.float32)
    wh[:, :OW2 * C2, :] = wh_core
    wh = wh.reshape(OH2 * L2, HID)                             # (1024, 32)

    # misc blob: merged split-head weights + all four bias rows.
    misc = np.zeros((MISC_ROWS, 128), np.float32)
    misc[0:HID, 0:S_LR] = np.concatenate([wl.T, wr.T], axis=1)  # (32, 16)
    misc[ROW_B1, 0:OW1 * C1] = np.tile(b1, OW1)                # lane = ow*C1 + c
    misc[ROW_B2, 0:OW2 * C2] = np.tile(b2, OW2)
    misc[ROW_BLIN, 0:HID] = blin
    misc[ROW_BLR, 0:S_LR] = np.concatenate([bl, br])

    return tuple(jnp.asarray(a) for a in (wc, wh, misc))


# ----------------------------------------------------------------------------
# Full model forward: one fused pallas_call, two outputs (left, right).
# ----------------------------------------------------------------------------
@jax.jit
def model_forward(x_nchw, prepped):
    wc, wh, misc = prepped
    n = x_nchw.shape[0]
    # Tiny one-off layout change of the 8 KB input (NCHW -> rows=(n,h),
    # lanes=(w,cin) zero-padded to 128); allow_input_fusion lets XLA fold it
    # into the pallas_call input instead of a standalone launch.
    x3 = jnp.transpose(x_nchw, (0, 2, 3, 1)).reshape(n, H, W * CIN)
    x3 = jnp.pad(x3, ((0, 0), (0, 0), (0, LIN - W * CIN)))

    vmem = pl.BlockSpec(memory_space=pltpu.MemorySpace.VMEM)
    left, right = pl.pallas_call(
        _fused_forward_kernel,
        out_shape=(jax.ShapeDtypeStruct((n, S_L), jnp.float32),
                   jax.ShapeDtypeStruct((n, S_R), jnp.float32)),
        in_specs=[vmem, vmem, vmem, vmem],
        out_specs=(vmem, vmem),
        compiler_params=pltpu.CompilerParams(
            allow_input_fusion=[True, False, False, False]),
    )(x3, wc, wh, misc)
    return left, right


# Pure-JAX reference for verification (uses the original PyTorch-layout params).
def reference_forward(x_nchw, params):
    (w1, b1, w2, b2, wlin, blin, wl, bl, wr, br) = params
    dn = ('NCHW', 'OIHW', 'NCHW')
    y = jax.lax.conv_general_dilated(x_nchw, w1, (1, 1), 'VALID',
                                     dimension_numbers=dn) + b1.reshape(1, -1, 1, 1)
    y = jnp.maximum(y, 0.0)
    y = jax.lax.conv_general_dilated(y, w2, (1, 1), 'VALID',
                                     dimension_numbers=dn) + b2.reshape(1, -1, 1, 1)
    y = y.reshape(y.shape[0], -1)
    y = jnp.maximum(y, 0.0)
    y = jnp.maximum(y @ wlin.T + blin, 0.0)
    return y @ wl.T + bl, y @ wr.T + br


def _uniform(key, shape, bound):
    return jax.random.uniform(key, shape, jnp.float32, -bound, bound)


if __name__ == "__main__":
    key = jax.random.PRNGKey(0)
    keys = jax.random.split(key, 11)

    # Deterministic PyTorch-style uniform init: U(-1/sqrt(fan_in), 1/sqrt(fan_in)).
    b_c1 = 1.0 / (CIN * K * K) ** 0.5
    b_c2 = 1.0 / (C1 * K * K) ** 0.5
    b_l1 = 1.0 / FLAT ** 0.5
    b_sp = 1.0 / HID ** 0.5
    params = (
        _uniform(keys[0], (C1, CIN, K, K), b_c1), _uniform(keys[1], (C1,), b_c1),
        _uniform(keys[2], (C2, C1, K, K), b_c2),  _uniform(keys[3], (C2,), b_c2),
        _uniform(keys[4], (HID, FLAT), b_l1),     _uniform(keys[5], (HID,), b_l1),
        _uniform(keys[6], (S_L, HID), b_sp),      _uniform(keys[7], (S_L,), b_sp),
        _uniform(keys[8], (S_R, HID), b_sp),      _uniform(keys[9], (S_R,), b_sp),
    )

    x = jax.random.normal(keys[10], (N_BATCH, CIN, H, W), jnp.float32)   # NCHW

    prepped = prepare_params(params)            # one-time host-side packing
    out_l, out_r = model_forward(x, prepped)
    jax.block_until_ready((out_l, out_r))

    ref_l, ref_r = reference_forward(x, params)
    assert out_l.shape == (N_BATCH, S_L) and out_r.shape == (N_BATCH, S_R)
    assert jnp.allclose(out_l, ref_l, atol=1e-3, rtol=1e-3)
    assert jnp.allclose(out_r, ref_r, atol=1e-3, rtol=1e-3)

    print("KERNEL_OK")
</pallas_src>

<mosaic_0001>
module attributes {stable_mosaic.version = 11 : i64} {
  func.func @_fused_forward_kernel(%arg0: memref<2x16x128xf32, #tpu.memory_space<vmem>>, %arg1: memref<1280x128xf32, #tpu.memory_space<vmem>>, %arg2: memref<1024x32xf32, #tpu.memory_space<vmem>>, %arg3: memref<36x128xf32, #tpu.memory_space<vmem>>, %arg4: memref<2x8xf32, #tpu.memory_space<vmem>>, %arg5: memref<2x8xf32, #tpu.memory_space<vmem>>) attributes {dimension_semantics = [], scalar_prefetch = 0 : i64, scratch_operands = 0 : i64, tpu.core_type = #tpu.core_type<tc>} {
    %c0 = arith.constant 0 : index
    %c0_0 = arith.constant 0 : index
    %c0_1 = arith.constant 0 : index
    %0 = vector.load %arg0[%c0, %c0_0, %c0_1] : memref<2x16x128xf32, #tpu.memory_space<vmem>>, vector<2x12x128xf32>
    %1 = vector.shape_cast %0 : vector<2x12x128xf32> to vector<24x128xf32>
    %c0_2 = arith.constant 0 : index
    %c1 = arith.constant 1 : index
    %c0_3 = arith.constant 0 : index
    %2 = vector.load %arg0[%c0_2, %c1, %c0_3] : memref<2x16x128xf32, #tpu.memory_space<vmem>>, vector<2x12x128xf32>
    %3 = vector.shape_cast %2 : vector<2x12x128xf32> to vector<24x128xf32>
    %c0_4 = arith.constant 0 : index
    %c2 = arith.constant 2 : index
    %c0_5 = arith.constant 0 : index
    %4 = vector.load %arg0[%c0_4, %c2, %c0_5] : memref<2x16x128xf32, #tpu.memory_space<vmem>>, vector<2x12x128xf32>
    %5 = vector.shape_cast %4 : vector<2x12x128xf32> to vector<24x128xf32>
    %c0_6 = arith.constant 0 : index
    %c3 = arith.constant 3 : index
    %c0_7 = arith.constant 0 : index
    %6 = vector.load %arg0[%c0_6, %c3, %c0_7] : memref<2x16x128xf32, #tpu.memory_space<vmem>>, vector<2x12x128xf32>
    %7 = vector.shape_cast %6 : vector<2x12x128xf32> to vector<24x128xf32>
    %c0_8 = arith.constant 0 : index
    %c4 = arith.constant 4 : index
    %c0_9 = arith.constant 0 : index
    %8 = vector.load %arg0[%c0_8, %c4, %c0_9] : memref<2x16x128xf32, #tpu.memory_space<vmem>>, vector<2x12x128xf32>
    %9 = vector.shape_cast %8 : vector<2x12x128xf32> to vector<24x128xf32>
    %10 = tpu.concatenate %1, %3, %5, %7, %9 in 1 : vector<24x128xf32>, vector<24x128xf32>, vector<24x128xf32>, vector<24x128xf32>, vector<24x128xf32> -> vector<24x640xf32>
    %c0_10 = arith.constant 0 : index
    %c0_11 = arith.constant 0 : index
    %11 = vector.load %arg1[%c0_10, %c0_11] : memref<1280x128xf32, #tpu.memory_space<vmem>>, vector<640x128xf32>
    %cst = arith.constant dense<0.000000e+00> : vector<24x128xf32>
    %12 = tpu.matmul %10, %11, %cst {dimension_numbers = #tpu.dot_dimension_numbers<[1], [0], [0], [1], [0, 0, 1, 1], [], []>} : vector<24x640xf32>, vector<640x128xf32>, vector<24x128xf32> -> vector<24x128xf32>
    %c32 = arith.constant 32 : index
    %c0_12 = arith.constant 0 : index
    %13 = vector.load %arg3[%c32, %c0_12] : memref<36x128xf32, #tpu.memory_space<vmem>>, vector<1x128xf32>
    %14 = vector.broadcast %13 : vector<1x128xf32> to vector<24x128xf32>
    %15 = arith.addf %12, %14 : vector<24x128xf32>
    %cst_13 = arith.constant 0.000000e+00 : f32
    %16 = vector.broadcast %cst_13 : f32 to vector<24x128xf32>
    %17 = arith.maximumf %15, %16 : vector<24x128xf32>
    %18 = vector.shape_cast %17 : vector<24x128xf32> to vector<2x12x128xf32>
    %19 = vector.extract_strided_slice %18 {offsets = [0, 0, 0], sizes = [2, 8, 128], strides = [1, 1, 1]} : vector<2x12x128xf32> to vector<2x8x128xf32>
    %20 = vector.shape_cast %19 : vector<2x8x128xf32> to vector<16x128xf32>
    %21 = vector.extract_strided_slice %18 {offsets = [0, 1, 0], sizes = [2, 8, 128], strides = [1, 1, 1]} : vector<2x12x128xf32> to vector<2x8x128xf32>
    %22 = vector.shape_cast %21 : vector<2x8x128xf32> to vector<16x128xf32>
    %23 = vector.extract_strided_slice %18 {offsets = [0, 2, 0], sizes = [2, 8, 128], strides = [1, 1, 1]} : vector<2x12x128xf32> to vector<2x8x128xf32>
    %24 = vector.shape_cast %23 : vector<2x8x128xf32> to vector<16x128xf32>
    %25 = vector.extract_strided_slice %18 {offsets = [0, 3, 0], sizes = [2, 8, 128], strides = [1, 1, 1]} : vector<2x12x128xf32> to vector<2x8x128xf32>
    %26 = vector.shape_cast %25 : vector<2x8x128xf32> to vector<16x128xf32>
    %27 = vector.extract_strided_slice %18 {offsets = [0, 4, 0], sizes = [2, 8, 128], strides = [1, 1, 1]} : vector<2x12x128xf32> to vector<2x8x128xf32>
    %28 = vector.shape_cast %27 : vector<2x8x128xf32> to vector<16x128xf32>
    %29 = tpu.concatenate %20, %22, %24, %26, %28 in 1 : vector<16x128xf32>, vector<16x128xf32>, vector<16x128xf32>, vector<16x128xf32>, vector<16x128xf32> -> vector<16x640xf32>
    %c640 = arith.constant 640 : index
    %c0_14 = arith.constant 0 : index
    %30 = vector.load %arg1[%c640, %c0_14] : memref<1280x128xf32, #tpu.memory_space<vmem>>, vector<640x128xf32>
    %cst_15 = arith.constant dense<0.000000e+00> : vector<16x128xf32>
    %31 = tpu.matmul %29, %30, %cst_15 {dimension_numbers = #tpu.dot_dimension_numbers<[1], [0], [0], [1], [0, 0, 1, 1], [], []>} : vector<16x640xf32>, vector<640x128xf32>, vector<16x128xf32> -> vector<16x128xf32>
    %c33 = arith.constant 33 : index
    %c0_16 = arith.constant 0 : index
    %32 = vector.load %arg3[%c33, %c0_16] : memref<36x128xf32, #tpu.memory_space<vmem>>, vector<1x128xf32>
    %33 = vector.broadcast %32 : vector<1x128xf32> to vector<16x128xf32>
    %34 = arith.addf %31, %33 : vector<16x128xf32>
    %cst_17 = arith.constant 0.000000e+00 : f32
    %35 = vector.broadcast %cst_17 : f32 to vector<16x128xf32>
    %36 = arith.maximumf %34, %35 : vector<16x128xf32>
    %37 = vector.shape_cast %36 : vector<16x128xf32> to vector<2x1024xf32>
    %c0_18 = arith.constant 0 : index
    %c0_19 = arith.constant 0 : index
    %38 = vector.load %arg2[%c0_18, %c0_19] : memref<1024x32xf32, #tpu.memory_space<vmem>>, vector<1024x32xf32>
    %cst_20 = arith.constant dense<0.000000e+00> : vector<2x32xf32>
    %39 = tpu.matmul %37, %38, %cst_20 {dimension_numbers = #tpu.dot_dimension_numbers<[1], [0], [0], [1], [0, 0, 1, 1], [], []>} : vector<2x1024xf32>, vector<1024x32xf32>, vector<2x32xf32> -> vector<2x32xf32>
    %c34 = arith.constant 34 : index
    %c0_21 = arith.constant 0 : index
    %40 = vector.load %arg3[%c34, %c0_21] : memref<36x128xf32, #tpu.memory_space<vmem>>, vector<1x32xf32>
    %41 = vector.broadcast %40 : vector<1x32xf32> to vector<2x32xf32>
    %42 = arith.addf %39, %41 : vector<2x32xf32>
    %cst_22 = arith.constant 0.000000e+00 : f32
    %43 = vector.broadcast %cst_22 : f32 to vector<2x32xf32>
    %44 = arith.maximumf %42, %43 : vector<2x32xf32>
    %c0_23 = arith.constant 0 : index
    %c0_24 = arith.constant 0 : index
    %45 = vector.load %arg3[%c0_23, %c0_24] : memref<36x128xf32, #tpu.memory_space<vmem>>, vector<32x16xf32>
    %cst_25 = arith.constant dense<0.000000e+00> : vector<2x16xf32>
    %46 = tpu.matmul %44, %45, %cst_25 {dimension_numbers = #tpu.dot_dimension_numbers<[1], [0], [0], [1], [0, 0, 1, 1], [], []>} : vector<2x32xf32>, vector<32x16xf32>, vector<2x16xf32> -> vector<2x16xf32>
    %c35 = arith.constant 35 : index
    %c0_26 = arith.constant 0 : index
    %47 = vector.load %arg3[%c35, %c0_26] : memref<36x128xf32, #tpu.memory_space<vmem>>, vector<1x16xf32>
    %48 = vector.broadcast %47 : vector<1x16xf32> to vector<2x16xf32>
    %49 = arith.addf %46, %48 : vector<2x16xf32>
    %50 = vector.extract_strided_slice %49 {offsets = [0, 0], sizes = [2, 8], strides = [1, 1]} : vector<2x16xf32> to vector<2x8xf32>
    %c0_27 = arith.constant 0 : index
    %c0_28 = arith.constant 0 : index
    %51 = vector.load %arg4[%c0_27, %c0_28] : memref<2x8xf32, #tpu.memory_space<vmem>>, vector<2x8xf32>
    tpu.vector_store %arg4[%c0_27, %c0_28], %50 {strides = array<i32>} : memref<2x8xf32, #tpu.memory_space<vmem>>, vector<2x8xf32>,
    %52 = vector.extract_strided_slice %49 {offsets = [0, 8], sizes = [2, 8], strides = [1, 1]} : vector<2x16xf32> to vector<2x8xf32>
    %c0_29 = arith.constant 0 : index
    %c0_30 = arith.constant 0 : index
    %53 = vector.load %arg5[%c0_29, %c0_30] : memref<2x8xf32, #tpu.memory_space<vmem>>, vector<2x8xf32>
    tpu.vector_store %arg5[%c0_29, %c0_30], %52 {strides = array<i32>} : memref<2x8xf32, #tpu.memory_space<vmem>>, vector<2x8xf32>,
    return
  }
}

</mosaic_0001>

<llo_original>
// kernel: model_forward.2
$region0: #{model_forward.2}
  #allocation0 [shape = 'u32[]', space=smem, size = 0x4, offset = 0x4, fixed_abs, tag = 'smem constant byte address 0x4 - core index']
  #allocation1 [shape = 'u32[144,128]{1,0:T(1,128)}', space=vmem, size = 0x12000, scoped, tag = 'internal scratch']
  #allocation2 [shape = 'u32[2048]{0}', space=vmem, size = 0x2000, scoped, tag = 'scoped memory for model_forward.2']
  #allocation3 [shape = 'u32[2048]{0}', space=vmem, size = 0x2000, scoped, tag = 'scoped memory for model_forward.2']
  #allocation4 [shape = 'u32[2048]{0}', space=vmem, size = 0x2000, scoped, tag = 'scoped memory for model_forward.2']
  #allocation5 [shape = 'u32[2048]{0}', space=vmem, size = 0x2000, scoped, tag = 'scoped memory for model_forward.2']
  #allocation6 [shape = 'u32[2048]{0}', space=vmem, size = 0x2000, scoped, tag = 'scoped memory for model_forward.2']
  %s0 = inlined_call_operand.vmem [shape: f32[1280,128], index: 0, kind: input, shape index: {}]
  %s1 = inlined_call_operand.vmem [shape: f32[1024,32], index: 1, kind: input, shape index: {}]
  %s2 = inlined_call_operand.vmem [shape: f32[36,128], index: 2, kind: input, shape index: {}]
  %s3 = inlined_call_operand.vmem [shape: f32[2,16,64], index: 3, kind: input, shape index: {}]
  %s4 = inlined_call_operand.<no memory space> [shape: f32[], index: 4, kind: input, shape index: {}]
  %s5 = inlined_call_operand.hbm [shape: f32[2,8], index: 5, kind: output, shape index: {0}]
  %s6 = inlined_call_operand.hbm [shape: f32[2,8], index: 6, kind: output, shape index: {1}]
  %7 = xla_tuple %s5, %s6
  %s8 = sld [smem:[#allocation0]]
  $region34: #{model_forward.2} parent=0
    _
  %s10 = ssub.s32 1, %s8
  %s11 = scalar_select 0, %s10, %s8
  %v12 = vstv %s4
  $region1: #{model_forward.2} parent=0
    #allocation7 [shape = 'u8[1024]{0}', space=vmem, size = 0x400, scoped, tag = 'output window, operand 0, single buffered']
    #allocation8 [shape = 's32[1]{0}', space=sflag, size = 0x4, scoped, tag = 'scoped memory for model_forward.2']
    #allocation9 [shape = 'u8[1024]{0}', space=vmem, size = 0x400, scoped, tag = 'output window, operand 1, single buffered']
    #allocation10 [shape = 's32[1]{0}', space=sflag, size = 0x4, scoped, tag = 'scoped memory for model_forward.2']
    #allocation11 [shape = 'u8[16384]{0}', space=vmem, size = 0x4000, dematerialized = true, scoped, tag = 'FusionAdapter Buffer %fusion.1 = f32[2,16,128]{2,1,0:T(8,128)} fusion(%param_3.1, %param_4), kind=kLoop, calls=%fused_computation.1.clone, metadata={op_name="jit(model_forward)/jit(_pad)/pad" stack_frame_id=8}']
    %13 = vsyncpa [#allocation8], 0
    %14 = vsyncpa [#allocation10], 0
    // Predicated region
    $region2: #{model_forward.2} parent=1 // pred_check
      _
    $region3: #{model_forward.2} parent=1 // pred_check_branch
      %16 = sbr.rel (0) target = $region5
    $region4: #{model_forward.2} parent=1 // pred_region
      _
    $region5: #{model_forward.2} parent=1 // pred_fallthru
      _
    // Predicated region
    $region6: #{model_forward.2} parent=1 // pred_check
      _
    $region7: #{model_forward.2} parent=1 // pred_check_branch
      %18 = sbr.rel (0) target = $region9
    $region8: #{model_forward.2} parent=1 // pred_region
      _
    $region9: #{model_forward.2} parent=1 // pred_fallthru
      _
    // Predicated region
    $region10: #{model_forward.2} parent=1 // pred_check
      _
    $region11: #{model_forward.2} parent=1 // pred_check_branch
      %20 = sbr.rel (0) target = $region13
    $region12: #{model_forward.2} parent=1 // pred_region
      _
    $region13: #{model_forward.2} parent=1 // pred_fallthru
      _
    // Predicated region
    $region14: #{model_forward.2} parent=1 // pred_check
      _
    $region15: #{model_forward.2} parent=1 // pred_check_branch
      %22 = sbr.rel (0) target = $region17
    $region16: #{model_forward.2} parent=1 // pred_region
      _
    $region17: #{model_forward.2} parent=1 // pred_fallthru
      _
    %v23 = vld [vmem:[%s3] sm:$0xff]
    %v24 = vlaneseq
    %v25 = vand.u32 %v24, 127
    %vm27 = vcmp.lt.s32.totalorder %v25, 64
    %v28 = vsel %vm27, %v23, %v12
    %s30 = ssub.s32 256, 1
    %31 = vst [vmem:[#allocation11] sm:%s30] %v28
    %s32 = scalar_lea.vmem %s3, 8
    %v33 = vld [vmem:[%s32] sm:$0xff]
    %v34 = vlaneseq
    %v35 = vand.u32 %v34, 127
    %vm37 = vcmp.lt.s32.totalorder %v35, 64
    %v38 = vsel %vm37, %v33, %v12
    %s39 = scalar_lea.vmem [#allocation11], 8
    %s41 = ssub.s32 256, 1
    %42 = vst [vmem:[%s39] sm:%s41] %v38
    %s43 = scalar_lea.vmem %s3, 16
    %v44 = vld [vmem:[%s43] sm:$0xff]
    %v45 = vlaneseq
    %v46 = vand.u32 %v45, 127
    %vm48 = vcmp.lt.s32.totalorder %v46, 64
    %v49 = vsel %vm48, %v44, %v12
    %s50 = scalar_lea.vmem [#allocation11], 16
    %s52 = ssub.s32 256, 1
    %53 = vst [vmem:[%s50] sm:%s52] %v49
    %s54 = scalar_lea.vmem %s3, 24
    %v55 = vld [vmem:[%s54] sm:$0xff]
    %v56 = vlaneseq
    %v57 = vand.u32 %v56, 127
    %vm59 = vcmp.lt.s32.totalorder %v57, 64
    %v60 = vsel %vm59, %v55, %v12
    %s61 = scalar_lea.vmem [#allocation11], 24
    %s63 = ssub.s32 256, 1
    %64 = vst [vmem:[%s61] sm:%s63] %v60
    %v65 = vld [vmem:[#allocation11] sm:$0xff]
    %v66 = vld [vmem:[#allocation11 + $0x8] sm:$0xf]
    %v67 = vld [vmem:[#allocation11 + $0x10] sm:$0xff]
    %v68 = vld [vmem:[#allocation11 + $0x18] sm:$0xf]
    %v73 = vcombine.high %v65, %v65
    %v74 = vcombine.high %v67, %v67
    %v75 = vld [vmem:[#allocation11 + $0x1] sm:$0xff]
    %v76 = vld [vmem:[#allocation11 + $0x9] sm:$0xf]
    %v77 = vld [vmem:[#allocation11 + $0x11] sm:$0xff]
    %v78 = vld [vmem:[#allocation11 + $0x19] sm:$0xf]
    %v83 = vcombine.high %v75, %v75
    %v84 = vcombine.high %v77, %v77
    %v85 = vld [vmem:[#allocation11 + $0x2] sm:$0xff]
    %v86 = vld [vmem:[#allocation11 + $0xa] sm:$0xf]
    %v87 = vld [vmem:[#allocation11 + $0x12] sm:$0xff]
    %v88 = vld [vmem:[#allocation11 + $0x1a] sm:$0xf]
    %v93 = vcombine.high %v85, %v85
    %v94 = vcombine.high %v87, %v87
    %v95 = vld [vmem:[#allocation11 + $0x3] sm:$0xff]
    %v96 = vld [vmem:[#allocation11 + $0xb] sm:$0xf]
    %v97 = vld [vmem:[#allocation11 + $0x13] sm:$0xff]
    %v98 = vld [vmem:[#allocation11 + $0x1b] sm:$0xf]
    %v103 = vcombine.high %v95, %v95
    %v104 = vcombine.high %v97, %v97
    %v105 = vld [vmem:[#allocation11 + $0x4] sm:$0xff]
    %v106 = vld [vmem:[#allocation11 + $0xc] sm:$0xf]
    %v107 = vld [vmem:[#allocation11 + $0x14] sm:$0xff]
    %v108 = vld [vmem:[#allocation11 + $0x1c] sm:$0xf]
    %v113 = vcombine.high %v105, %v105
    %v114 = vcombine.high %v107, %v107
    %v115 = vcombine.low %v65, %v73
    %v116 = vcombine.low %v66, %v67
    %v117 = vcombine.low %v74, %v68
    %v121 = vcombine.low %v75, %v83
    %v122 = vcombine.low %v76, %v77
    %v123 = vcombine.low %v84, %v78
    %v127 = vcombine.low %v85, %v93
    %v128 = vcombine.low %v86, %v87
    %v129 = vcombine.low %v94, %v88
    %v133 = vcombine.low %v95, %v103
    %v134 = vcombine.low %v96, %v97
    %v135 = vcombine.low %v104, %v98
    %v139 = vcombine.low %v105, %v113
    %v140 = vcombine.low %v106, %v107
    %v141 = vcombine.low %v114, %v108
    %v145 = vld [vmem:[%s0] sm:$0xff]
    %v146 = vld [vmem:[%s0 + $0x8] sm:$0xff]
    %v147 = vld [vmem:[%s0 + $0x10] sm:$0xff]
    %v148 = vld [vmem:[%s0 + $0x18] sm:$0xff]
    %v149 = vld [vmem:[%s0 + $0x20] sm:$0xff]
    %v150 = vld [vmem:[%s0 + $0x28] sm:$0xff]
    %v151 = vld [vmem:[%s0 + $0x30] sm:$0xff]
    %v152 = vld [vmem:[%s0 + $0x38] sm:$0xff]
    %v153 = vld [vmem:[%s0 + $0x40] sm:$0xff]
    %v154 = vld [vmem:[%s0 + $0x48] sm:$0xff]
    %v155 = vld [vmem:[%s0 + $0x50] sm:$0xff]
    %v156 = vld [vmem:[%s0 + $0x58] sm:$0xff]
    %v157 = vld [vmem:[%s0 + $0x60] sm:$0xff]
    %v158 = vld [vmem:[%s0 + $0x68] sm:$0xff]
    %v159 = vld [vmem:[%s0 + $0x70] sm:$0xff]
    %v160 = vld [vmem:[%s0 + $0x78] sm:$0xff]
    %v161 = vld [vmem:[%s0 + $0x80] sm:$0xff]
    %v162 = vld [vmem:[%s0 + $0x88] sm:$0xff]
    %v163 = vld [vmem:[%s0 + $0x90] sm:$0xff]
    %v164 = vld [vmem:[%s0 + $0x98] sm:$0xff]
    %v165 = vld [vmem:[%s0 + $0xa0] sm:$0xff]
    %v166 = vld [vmem:[%s0 + $0xa8] sm:$0xff]
    %v167 = vld [vmem:[%s0 + $0xb0] sm:$0xff]
    %v168 = vld [vmem:[%s0 + $0xb8] sm:$0xff]
    %v169 = vld [vmem:[%s0 + $0xc0] sm:$0xff]
    %v170 = vld [vmem:[%s0 + $0xc8] sm:$0xff]
    %v171 = vld [vmem:[%s0 + $0xd0] sm:$0xff]
    %v172 = vld [vmem:[%s0 + $0xd8] sm:$0xff]
    %v173 = vld [vmem:[%s0 + $0xe0] sm:$0xff]
    %v174 = vld [vmem:[%s0 + $0xe8] sm:$0xff]
    %v175 = vld [vmem:[%s0 + $0xf0] sm:$0xff]
    %v176 = vld [vmem:[%s0 + $0xf8] sm:$0xff]
    %v177 = vld [vmem:[%s0 + $0x100] sm:$0xff]
    %v178 = vld [vmem:[%s0 + $0x108] sm:$0xff]
    %v179 = vld [vmem:[%s0 + $0x110] sm:$0xff]
    %v180 = vld [vmem:[%s0 + $0x118] sm:$0xff]
    %v181 = vld [vmem:[%s0 + $0x120] sm:$0xff]
    %v182 = vld [vmem:[%s0 + $0x128] sm:$0xff]
    %v183 = vld [vmem:[%s0 + $0x130] sm:$0xff]
    %v184 = vld [vmem:[%s0 + $0x138] sm:$0xff]
    %v185 = vld [vmem:[%s0 + $0x140] sm:$0xff]
    %v186 = vld [vmem:[%s0 + $0x148] sm:$0xff]
    %v187 = vld [vmem:[%s0 + $0x150] sm:$0xff]
    %v188 = vld [vmem:[%s0 + $0x158] sm:$0xff]
    %v189 = vld [vmem:[%s0 + $0x160] sm:$0xff]
    %v190 = vld [vmem:[%s0 + $0x168] sm:$0xff]
    %v191 = vld [vmem:[%s0 + $0x170] sm:$0xff]
    %v192 = vld [vmem:[%s0 + $0x178] sm:$0xff]
    %v193 = vld [vmem:[%s0 + $0x180] sm:$0xff]
    %v194 = vld [vmem:[%s0 + $0x188] sm:$0xff]
    %v195 = vld [vmem:[%s0 + $0x190] sm:$0xff]
    %v196 = vld [vmem:[%s0 + $0x198] sm:$0xff]
    %v197 = vld [vmem:[%s0 + $0x1a0] sm:$0xff]
    %v198 = vld [vmem:[%s0 + $0x1a8] sm:$0xff]
    %v199 = vld [vmem:[%s0 + $0x1b0] sm:$0xff]
    %v200 = vld [vmem:[%s0 + $0x1b8] sm:$0xff]
    %v201 = vld [vmem:[%s0 + $0x1c0] sm:$0xff]
    %v202 = vld [vmem:[%s0 + $0x1c8] sm:$0xff]
    %v203 = vld [vmem:[%s0 + $0x1d0] sm:$0xff]
    %v204 = vld [vmem:[%s0 + $0x1d8] sm:$0xff]
    %v205 = vld [vmem:[%s0 + $0x1e0] sm:$0xff]
    %v206 = vld [vmem:[%s0 + $0x1e8] sm:$0xff]
    %v207 = vld [vmem:[%s0 + $0x1f0] sm:$0xff]
    %v208 = vld [vmem:[%s0 + $0x1f8] sm:$0xff]
    %v209 = vld [vmem:[%s0 + $0x200] sm:$0xff]
    %v210 = vld [vmem:[%s0 + $0x208] sm:$0xff]
    %v211 = vld [vmem:[%s0 + $0x210] sm:$0xff]
    %v212 = vld [vmem:[%s0 + $0x218] sm:$0xff]
    %v213 = vld [vmem:[%s0 + $0x220] sm:$0xff]
    %v214 = vld [vmem:[%s0 + $0x228] sm:$0xff]
    %v215 = vld [vmem:[%s0 + $0x230] sm:$0xff]
    %v216 = vld [vmem:[%s0 + $0x238] sm:$0xff]
    %v217 = vld [vmem:[%s0 + $0x240] sm:$0xff]
    %v218 = vld [vmem:[%s0 + $0x248] sm:$0xff]
    %v219 = vld [vmem:[%s0 + $0x250] sm:$0xff]
    %v220 = vld [vmem:[%s0 + $0x258] sm:$0xff]
    %v221 = vld [vmem:[%s0 + $0x260] sm:$0xff]
    %v222 = vld [vmem:[%s0 + $0x268] sm:$0xff]
    %v223 = vld [vmem:[%s0 + $0x270] sm:$0xff]
    %v224 = vld [vmem:[%s0 + $0x278] sm:$0xff]
    %v225 = vld [vmem:[%s2 + $0x20] sm:$0x1]
    %v226 = vlaneseq
    %v227 = vshrl.u32 %v226, 7
    %v228 = vsub.s32 0, %v227
    %v229 = vrot.slane %v225, %v228
    %230 = vmatprep.subr.mxu0 0.0
    %231 = vmatpush1.msra.mxu0 %v160
    %232 = vmatprep.subr.mxu0 0.0
    %233 = vmatpush1.msra.mxu0 %v159
    %234 = vmatprep.subr.mxu0 0.0
    %235 = vmatpush1.msra.mxu0 %v158
    %236 = vmatprep.subr.mxu0 0.0
    %237 = vmatpush1.msra.mxu0 %v157
    %238 = vmatprep.subr.mxu0 0.0
    %239 = vmatpush1.msra.mxu0 %v156
    %240 = vmatprep.subr.mxu0 0.0
    %241 = vmatpush1.msra.mxu0 %v155
    %242 = vmatprep.subr.mxu0 0.0
    %243 = vmatpush1.msra.mxu0 %v154
    %244 = vmatprep.subr.mxu0 0.0
    %245 = vmatpush1.msra.mxu0 %v153
    %246 = vmatprep.subr.mxu0 0.0
    %247 = vmatpush1.msra.mxu0 %v152
    %248 = vmatprep.subr.mxu0 0.0
    %249 = vmatpush1.msra.mxu0 %v151
    %250 = vmatprep.subr.mxu0 0.0
    %251 = vmatpush1.msra.mxu0 %v150
    %252 = vmatprep.subr.mxu0 0.0
    %253 = vmatpush1.msra.mxu0 %v149
    %254 = vmatprep.subr.mxu0 0.0
    %255 = vmatpush1.msra.mxu0 %v148
    %256 = vmatprep.subr.mxu0 0.0
    %257 = vmatpush1.msra.mxu0 %v147
    %258 = vmatprep.subr.mxu0 0.0
    %259 = vmatpush1.msra.mxu0 %v146
    %260 = vmatprep.subr.mxu0 0.0
    %261 = vmatpush1.msra.mxu0 %v145
    %262 = vmatprep.subr.mxu0 0.0
    %263 = vmatpush2.msra.mxu0 %v176
    %264 = vmatprep.subr.mxu0 0.0
    %265 = vmatpush2.msra.mxu0 %v175
    %266 = vmatprep.subr.mxu0 0.0
    %267 = vmatpush2.msra.mxu0 %v174
    %268 = vmatprep.subr.mxu0 0.0
    %269 = vmatpush2.msra.mxu0 %v173
    %270 = vmatprep.subr.mxu0 0.0
    %271 = vmatpush2.msra.mxu0 %v172
    %272 = vmatprep.subr.mxu0 0.0
    %273 = vmatpush2.msra.mxu0 %v171
    %274 = vmatprep.subr.mxu0 0.0
    %275 = vmatpush2.msra.mxu0 %v170
    %276 = vmatprep.subr.mxu0 0.0
    %277 = vmatpush2.msra.mxu0 %v169
    %278 = vmatprep.subr.mxu0 0.0
    %279 = vmatpush2.msra.mxu0 %v168
    %280 = vmatprep.subr.mxu0 0.0
    %281 = vmatpush2.msra.mxu0 %v167
    %282 = vmatprep.subr.mxu0 0.0
    %283 = vmatpush2.msra.mxu0 %v166
    %284 = vmatprep.subr.mxu0 0.0
    %285 = vmatpush2.msra.mxu0 %v165
    %286 = vmatprep.subr.mxu0 0.0
    %287 = vmatpush2.msra.mxu0 %v164
    %288 = vmatprep.subr.mxu0 0.0
    %289 = vmatpush2.msra.mxu0 %v163
    %290 = vmatprep.subr.mxu0 0.0
    %291 = vmatpush2.msra.mxu0 %v162
    %292 = vmatprep.subr.mxu0 0.0
    %293 = vmatpush2.msra.mxu0 %v161
    %294 = vmatprep.mubr.f32.mxu0 %v121
    %295 = vmatmul.mubr.f32.gmra.mxu0 %v115
    %v296 = vpop.f32.mrf.mxu0
    %v297 = vadd.f32 %v229, %v296
    %v298 = vpop.f32.mrf.mxu0
    %299 = vmatprep.mubr.f32.mxu0 %v122
    %300 = vmatmul.mubr.f32.gmra.mxu0 %v116
    %v301 = vpop.f32.mrf.mxu0
    %v302 = vadd.f32 %v229, %v301
    %v303 = vpop.f32.mrf.mxu0
    %304 = vmatprep.mubr.f32.mxu0 %v123
    %305 = vmatmul.mubr.f32.gmra.mxu0 %v117
    %v306 = vpop.f32.mrf.mxu0
    %v307 = vadd.f32 %v229, %v306
    %v308 = vpop.f32.mrf.mxu0
    %309 = vdwg.mxu0
    %310 = vmatprep.subr.mxu0 0.0
    %311 = vmatpush1.msra.mxu0 %v192
    %312 = vmatprep.subr.mxu0 0.0
    %313 = vmatpush1.msra.mxu0 %v191
    %314 = vmatprep.subr.mxu0 0.0
    %315 = vmatpush1.msra.mxu0 %v190
    %316 = vmatprep.subr.mxu0 0.0
    %317 = vmatpush1.msra.mxu0 %v189
    %318 = vmatprep.subr.mxu0 0.0
    %319 = vmatpush1.msra.mxu0 %v188
    %320 = vmatprep.subr.mxu0 0.0
    %321 = vmatpush1.msra.mxu0 %v187
    %322 = vmatprep.subr.mxu0 0.0
    %323 = vmatpush1.msra.mxu0 %v186
    %324 = vmatprep.subr.mxu0 0.0
    %325 = vmatpush1.msra.mxu0 %v185
    %326 = vmatprep.subr.mxu0 0.0
    %327 = vmatpush1.msra.mxu0 %v184
    %328 = vmatprep.subr.mxu0 0.0
    %329 = vmatpush1.msra.mxu0 %v183
    %330 = vmatprep.subr.mxu0 0.0
    %331 = vmatpush1.msra.mxu0 %v182
    %332 = vmatprep.subr.mxu0 0.0
    %333 = vmatpush1.msra.mxu0 %v181
    %334 = vmatprep.subr.mxu0 0.0
    %335 = vmatpush1.msra.mxu0 %v180
    %336 = vmatprep.subr.mxu0 0.0
    %337 = vmatpush1.msra.mxu0 %v179
    %338 = vmatprep.subr.mxu0 0.0
    %339 = vmatpush1.msra.mxu0 %v178
    %340 = vmatprep.subr.mxu0 0.0
    %341 = vmatpush1.msra.mxu0 %v177
    %342 = vmatprep.subr.mxu0 0.0
    %343 = vmatpush2.msra.mxu0 %v208
    %344 = vmatprep.subr.mxu0 0.0
    %345 = vmatpush2.msra.mxu0 %v207
    %346 = vmatprep.subr.mxu0 0.0
    %347 = vmatpush2.msra.mxu0 %v206
    %348 = vmatprep.subr.mxu0 0.0
    %349 = vmatpush2.msra.mxu0 %v205
    %350 = vmatprep.subr.mxu0 0.0
    %351 = vmatpush2.msra.mxu0 %v204
    %352 = vmatprep.subr.mxu0 0.0
    %353 = vmatpush2.msra.mxu0 %v203
    %354 = vmatprep.subr.mxu0 0.0
    %355 = vmatpush2.msra.mxu0 %v202
    %356 = vmatprep.subr.mxu0 0.0
    %357 = vmatpush2.msra.mxu0 %v201
    %358 = vmatprep.subr.mxu0 0.0
    %359 = vmatpush2.msra.mxu0 %v200
    %360 = vmatprep.subr.mxu0 0.0
    %361 = vmatpush2.msra.mxu0 %v199
    %362 = vmatprep.subr.mxu0 0.0
    %363 = vmatpush2.msra.mxu0 %v198
    %364 = vmatprep.subr.mxu0 0.0
    %365 = vmatpush2.msra.mxu0 %v197
    %366 = vmatprep.subr.mxu0 0.0
    %367 = vmatpush2.msra.mxu0 %v196
    %368 = vmatprep.subr.mxu0 0.0
    %369 = vmatpush2.msra.mxu0 %v195
    %370 = vmatprep.subr.mxu0 0.0
    %371 = vmatpush2.msra.mxu0 %v194
    %372 = vmatprep.subr.mxu0 0.0
    %373 = vmatpush2.msra.mxu0 %v193
    %374 = vmatprep.mubr.f32.mxu0 %v133
    %375 = vmatmul.mubr.f32.gmra.mxu0 %v127
    %v376 = vpop.f32.mrf.mxu0
    %v377 = vadd.f32 %v297, %v376
    %v378 = vpop.f32.mrf.mxu0
    %379 = vmatprep.mubr.f32.mxu0 %v134
    %380 = vmatmul.mubr.f32.gmra.mxu0 %v128
    %v381 = vpop.f32.mrf.mxu0
    %v382 = vadd.f32 %v302, %v381
    %v383 = vpop.f32.mrf.mxu0
    %384 = vmatprep.mubr.f32.mxu0 %v135
    %385 = vmatmul.mubr.f32.gmra.mxu0 %v129
    %v386 = vpop.f32.mrf.mxu0
    %v387 = vadd.f32 %v307, %v386
    %v388 = vpop.f32.mrf.mxu0
    %389 = vdwg.mxu0
    %390 = vmatprep.subr.mxu0 0.0
    %391 = vmatpush1.msra.mxu0 %v224
    %392 = vmatprep.subr.mxu0 0.0
    %393 = vmatpush1.msra.mxu0 %v223
    %394 = vmatprep.subr.mxu0 0.0
    %395 = vmatpush1.msra.mxu0 %v222
    %396 = vmatprep.subr.mxu0 0.0
    %397 = vmatpush1.msra.mxu0 %v221
    %398 = vmatprep.subr.mxu0 0.0
    %399 = vmatpush1.msra.mxu0 %v220
    %400 = vmatprep.subr.mxu0 0.0
    %401 = vmatpush1.msra.mxu0 %v219
    %402 = vmatprep.subr.mxu0 0.0
    %403 = vmatpush1.msra.mxu0 %v218
    %404 = vmatprep.subr.mxu0 0.0
    %405 = vmatpush1.msra.mxu0 %v217
    %406 = vmatprep.subr.mxu0 0.0
    %407 = vmatpush1.msra.mxu0 %v216
    %408 = vmatprep.subr.mxu0 0.0
    %409 = vmatpush1.msra.mxu0 %v215
    %410 = vmatprep.subr.mxu0 0.0
    %411 = vmatpush1.msra.mxu0 %v214
    %412 = vmatprep.subr.mxu0 0.0
    %413 = vmatpush1.msra.mxu0 %v213
    %414 = vmatprep.subr.mxu0 0.0
    %415 = vmatpush1.msra.mxu0 %v212
    %416 = vmatprep.subr.mxu0 0.0
    %417 = vmatpush1.msra.mxu0 %v211
    %418 = vmatprep.subr.mxu0 0.0
    %419 = vmatpush1.msra.mxu0 %v210
    %420 = vmatprep.subr.mxu0 0.0
    %421 = vmatpush1.msra.mxu0 %v209
    %422 = vmatprep.subr.mxu0 0.0
    %423 = vmatpush2.msra.mxu0 0.0
    %424 = vmatprep.subr.mxu0 0.0
    %425 = vmatpush2.msra.mxu0 0.0
    %426 = vmatprep.subr.mxu0 0.0
    %427 = vmatpush2.msra.mxu0 0.0
    %428 = vmatprep.subr.mxu0 0.0
    %429 = vmatpush2.msra.mxu0 0.0
    %430 = vmatprep.subr.mxu0 0.0
    %431 = vmatpush2.msra.mxu0 0.0
    %432 = vmatprep.subr.mxu0 0.0
    %433 = vmatpush2.msra.mxu0 0.0
    %434 = vmatprep.subr.mxu0 0.0
    %435 = vmatpush2.msra.mxu0 0.0
    %436 = vmatprep.subr.mxu0 0.0
    %437 = vmatpush2.msra.mxu0 0.0
    %438 = vmatprep.subr.mxu0 0.0
    %439 = vmatpush2.msra.mxu0 0.0
    %440 = vmatprep.subr.mxu0 0.0
    %441 = vmatpush2.msra.mxu0 0.0
    %442 = vmatprep.subr.mxu0 0.0
    %443 = vmatpush2.msra.mxu0 0.0
    %444 = vmatprep.subr.mxu0 0.0
    %445 = vmatpush2.msra.mxu0 0.0
    %446 = vmatprep.subr.mxu0 0.0
    %447 = vmatpush2.msra.mxu0 0.0
    %448 = vmatprep.subr.mxu0 0.0
    %449 = vmatpush2.msra.mxu0 0.0
    %450 = vmatprep.subr.mxu0 0.0
    %451 = vmatpush2.msra.mxu0 0.0
    %452 = vmatprep.subr.mxu0 0.0
    %453 = vmatpush2.msra.mxu0 0.0
    %454 = vmatprep.mubr.f32.mxu0 0.0
    %455 = vmatmul.mubr.f32.gmra.mxu0 %v139
    %v456 = vpop.f32.mrf.mxu0
    %v457 = vadd.f32 %v377, %v456
    %v458 = vpop.f32.mrf.mxu0
    %459 = vmatprep.mubr.f32.mxu0 0.0
    %460 = vmatmul.mubr.f32.gmra.mxu0 %v140
    %v461 = vpop.f32.mrf.mxu0
    %v462 = vadd.f32 %v382, %v461
    %v463 = vpop.f32.mrf.mxu0
    %464 = vmatprep.mubr.f32.mxu0 0.0
    %465 = vmatmul.mubr.f32.gmra.mxu0 %v141
    %v466 = vpop.f32.mrf.mxu0
    %v467 = vadd.f32 %v387, %v466
    %v468 = vpop.f32.mrf.mxu0
    %469 = vdwg.mxu0
    %v470 = vmax.f32 %v457, 0.0
    %v471 = vmax.f32 %v462, 0.0
    %v472 = vmax.f32 %v467, 0.0
    %v476 = vcombine.high %v470, %v470
    %v477 = vcombine.high %v471, %v471
    %v478 = vcombine.high %v472, %v472
    %vm479 = vcmask 1042432
    %vm480 = vcmask 1046532
    %vm481 = vmor %vm479, %vm480
    %v482 = vrot.slane %v470, 5
    %v483 = vrot.slane %v482, 4
    %v484 = vrot.slane %v476, 5
    %v485 = vsel %vm481, %v483, %v484
    %v486 = vrot.slane %v484, 4
    %v487 = vrot.slane %v471, 5
    %v488 = vsel %vm481, %v486, %v487
    %v489 = vrot.slane %v477, 5
    %v490 = vrot.slane %v489, 4
    %v491 = vrot.slane %v472, 5
    %v492 = vsel %vm481, %v490, %v491
    %v493 = vrot.slane %v491, 4
    %v494 = vrot.slane %v478, 5
    %v495 = vsel %vm481, %v493, %v494
    %vm496 = vcmask 1041408
    %vm497 = vcmask 1045508
    %vm498 = vmor %vm496, %vm497
    %v499 = vrot.slane %v470, 6
    %v500 = vrot.slane %v499, 4
    %v501 = vrot.slane %v476, 6
    %v502 = vsel %vm498, %v500, %v501
    %v503 = vrot.slane %v501, 4
    %v504 = vrot.slane %v471, 6
    %v505 = vsel %vm498, %v503, %v504
    %v506 = vrot.slane %v477, 6
    %v507 = vrot.slane %v506, 4
    %v508 = vrot.slane %v472, 6
    %v509 = vsel %vm498, %v507, %v508
    %v510 = vrot.slane %v508, 4
    %v511 = vrot.slane %v478, 6
    %v512 = vsel %vm498, %v510, %v511
    %vm513 = vcmask 1040384
    %vm514 = vcmask 1044484
    %vm515 = vmor %vm513, %vm514
    %v516 = vrot.slane %v470, 7
    %v517 = vrot.slane %v516, 4
    %v518 = vrot.slane %v476, 7
    %v519 = vsel %vm515, %v517, %v518
    %v520 = vrot.slane %v518, 4
    %v521 = vrot.slane %v471, 7
    %v522 = vsel %vm515, %v520, %v521
    %v523 = vrot.slane %v477, 7
    %v524 = vrot.slane %v523, 4
    %v525 = vrot.slane %v472, 7
    %v526 = vsel %vm515, %v524, %v525
    %v527 = vrot.slane %v525, 4
    %v528 = vrot.slane %v478, 7
    %v529 = vsel %vm515, %v527, %v528
    %v530 = vcombine.low %v470, %v476
    %v531 = vcombine.low %v477, %v472
    %v534 = vcombine.low %v485, %v488
    %v535 = vcombine.low %v492, %v495
    %v538 = vcombine.low %v502, %v505
    %v539 = vcombine.low %v509, %v512
    %v542 = vcombine.low %v519, %v522
    %v543 = vcombine.low %v526, %v529
    %v546 = vcombine.low %v476, %v471
    %v547 = vcombine.low %v472, %v478
    %v550 = vld [vmem:[%s0 + $0x280] sm:$0xff]
    %v551 = vld [vmem:[%s0 + $0x288] sm:$0xff]
    %v552 = vld [vmem:[%s0 + $0x290] sm:$0xff]
    %v553 = vld [vmem:[%s0 + $0x298] sm:$0xff]
    %v554 = vld [vmem:[%s0 + $0x2a0] sm:$0xff]
    %v555 = vld [vmem:[%s0 + $0x2a8] sm:$0xff]
    %v556 = vld [vmem:[%s0 + $0x2b0] sm:$0xff]
    %v557 = vld [vmem:[%s0 + $0x2b8] sm:$0xff]
    %v558 = vld [vmem:[%s0 + $0x2c0] sm:$0xff]
    %v559 = vld [vmem:[%s0 + $0x2c8] sm:$0xff]
    %v560 = vld [vmem:[%s0 + $0x2d0] sm:$0xff]
    %v561 = vld [vmem:[%s0 + $0x2d8] sm:$0xff]
    %v562 = vld [vmem:[%s0 + $0x2e0] sm:$0xff]
    %v563 = vld [vmem:[%s0 + $0x2e8] sm:$0xff]
    %v564 = vld [vmem:[%s0 + $0x2f0] sm:$0xff]
    %v565 = vld [vmem:[%s0 + $0x2f8] sm:$0xff]
    %v566 = vld [vmem:[%s0 + $0x300] sm:$0xff]
    %v567 = vld [vmem:[%s0 + $0x308] sm:$0xff]
    %v568 = vld [vmem:[%s0 + $0x310] sm:$0xff]
    %v569 = vld [vmem:[%s0 + $0x318] sm:$0xff]
    %v570 = vld [vmem:[%s0 + $0x320] sm:$0xff]
    %v571 = vld [vmem:[%s0 + $0x328] sm:$0xff]
    %v572 = vld [vmem:[%s0 + $0x330] sm:$0xff]
    %v573 = vld [vmem:[%s0 + $0x338] sm:$0xff]
    %v574 = vld [vmem:[%s0 + $0x340] sm:$0xff]
    %v575 = vld [vmem:[%s0 + $0x348] sm:$0xff]
    %v576 = vld [vmem:[%s0 + $0x350] sm:$0xff]
    %v577 = vld [vmem:[%s0 + $0x358] sm:$0xff]
    %v578 = vld [vmem:[%s0 + $0x360] sm:$0xff]
    %v579 = vld [vmem:[%s0 + $0x368] sm:$0xff]
    %v580 = vld [vmem:[%s0 + $0x370] sm:$0xff]
    %v581 = vld [vmem:[%s0 + $0x378] sm:$0xff]
    %v582 = vld [vmem:[%s0 + $0x380] sm:$0xff]
    %v583 = vld [vmem:[%s0 + $0x388] sm:$0xff]
    %v584 = vld [vmem:[%s0 + $0x390] sm:$0xff]
    %v585 = vld [vmem:[%s0 + $0x398] sm:$0xff]
    %v586 = vld [vmem:[%s0 + $0x3a0] sm:$0xff]
    %v587 = vld [vmem:[%s0 + $0x3a8] sm:$0xff]
    %v588 = vld [vmem:[%s0 + $0x3b0] sm:$0xff]
    %v589 = vld [vmem:[%s0 + $0x3b8] sm:$0xff]
    %v590 = vld [vmem:[%s0 + $0x3c0] sm:$0xff]
    %v591 = vld [vmem:[%s0 + $0x3c8] sm:$0xff]
    %v592 = vld [vmem:[%s0 + $0x3d0] sm:$0xff]
    %v593 = vld [vmem:[%s0 + $0x3d8] sm:$0xff]
    %v594 = vld [vmem:[%s0 + $0x3e0] sm:$0xff]
    %v595 = vld [vmem:[%s0 + $0x3e8] sm:$0xff]
    %v596 = vld [vmem:[%s0 + $0x3f0] sm:$0xff]
    %v597 = vld [vmem:[%s0 + $0x3f8] sm:$0xff]
    %v598 = vld [vmem:[%s0 + $0x400] sm:$0xff]
    %v599 = vld [vmem:[%s0 + $0x408] sm:$0xff]
    %v600 = vld [vmem:[%s0 + $0x410] sm:$0xff]
    %v601 = vld [vmem:[%s0 + $0x418] sm:$0xff]
    %v602 = vld [vmem:[%s0 + $0x420] sm:$0xff]
    %v603 = vld [vmem:[%s0 + $0x428] sm:$0xff]
    %v604 = vld [vmem:[%s0 + $0x430] sm:$0xff]
    %v605 = vld [vmem:[%s0 + $0x438] sm:$0xff]
    %v606 = vld [vmem:[%s0 + $0x440] sm:$0xff]
    %v607 = vld [vmem:[%s0 + $0x448] sm:$0xff]
    %v608 = vld [vmem:[%s0 + $0x450] sm:$0xff]
    %v609 = vld [vmem:[%s0 + $0x458] sm:$0xff]
    %v610 = vld [vmem:[%s0 + $0x460] sm:$0xff]
    %v611 = vld [vmem:[%s0 + $0x468] sm:$0xff]
    %v612 = vld [vmem:[%s0 + $0x470] sm:$0xff]
    %v613 = vld [vmem:[%s0 + $0x478] sm:$0xff]
    %v614 = vld [vmem:[%s0 + $0x480] sm:$0xff]
    %v615 = vld [vmem:[%s0 + $0x488] sm:$0xff]
    %v616 = vld [vmem:[%s0 + $0x490] sm:$0xff]
    %v617 = vld [vmem:[%s0 + $0x498] sm:$0xff]
    %v618 = vld [vmem:[%s0 + $0x4a0] sm:$0xff]
    %v619 = vld [vmem:[%s0 + $0x4a8] sm:$0xff]
    %v620 = vld [vmem:[%s0 + $0x4b0] sm:$0xff]
    %v621 = vld [vmem:[%s0 + $0x4b8] sm:$0xff]
    %v622 = vld [vmem:[%s0 + $0x4c0] sm:$0xff]
    %v623 = vld [vmem:[%s0 + $0x4c8] sm:$0xff]
    %v624 = vld [vmem:[%s0 + $0x4d0] sm:$0xff]
    %v625 = vld [vmem:[%s0 + $0x4d8] sm:$0xff]
    %v626 = vld [vmem:[%s0 + $0x4e0] sm:$0xff]
    %v627 = vld [vmem:[%s0 + $0x4e8] sm:$0xff]
    %v628 = vld [vmem:[%s0 + $0x4f0] sm:$0xff]
    %v629 = vld [vmem:[%s0 + $0x4f8] sm:$0xff]
    %v630 = vld [vmem:[%s2 + $0x21] sm:$0x1]
    %v631 = vlaneseq
    %v632 = vshrl.u32 %v631, 7
    %v633 = vsub.s32 0, %v632
    %v634 = vrot.slane %v630, %v633
    %635 = vmatprep.subr.mxu0 0.0
    %636 = vmatpush1.msra.mxu0 %v565
    %637 = vmatprep.subr.mxu0 0.0
    %638 = vmatpush1.msra.mxu0 %v564
    %639 = vmatprep.subr.mxu0 0.0
    %640 = vmatpush1.msra.mxu0 %v563
    %641 = vmatprep.subr.mxu0 0.0
    %642 = vmatpush1.msra.mxu0 %v562
    %643 = vmatprep.subr.mxu0 0.0
    %644 = vmatpush1.msra.mxu0 %v561
    %645 = vmatprep.subr.mxu0 0.0
    %646 = vmatpush1.msra.mxu0 %v560
    %647 = vmatprep.subr.mxu0 0.0
    %648 = vmatpush1.msra.mxu0 %v559
    %649 = vmatprep.subr.mxu0 0.0
    %650 = vmatpush1.msra.mxu0 %v558
    %651 = vmatprep.subr.mxu0 0.0
    %652 = vmatpush1.msra.mxu0 %v557
    %653 = vmatprep.subr.mxu0 0.0
    %654 = vmatpush1.msra.mxu0 %v556
    %655 = vmatprep.subr.mxu0 0.0
    %656 = vmatpush1.msra.mxu0 %v555
    %657 = vmatprep.subr.mxu0 0.0
    %658 = vmatpush1.msra.mxu0 %v554
    %659 = vmatprep.subr.mxu0 0.0
    %660 = vmatpush1.msra.mxu0 %v553
    %661 = vmatprep.subr.mxu0 0.0
    %662 = vmatpush1.msra.mxu0 %v552
    %663 = vmatprep.subr.mxu0 0.0
    %664 = vmatpush1.msra.mxu0 %v551
    %665 = vmatprep.subr.mxu0 0.0
    %666 = vmatpush1.msra.mxu0 %v550
    %667 = vmatprep.subr.mxu0 0.0
    %668 = vmatpush2.msra.mxu0 %v581
    %669 = vmatprep.subr.mxu0 0.0
    %670 = vmatpush2.msra.mxu0 %v580
    %671 = vmatprep.subr.mxu0 0.0
    %672 = vmatpush2.msra.mxu0 %v579
    %673 = vmatprep.subr.mxu0 0.0
    %674 = vmatpush2.msra.mxu0 %v578
    %675 = vmatprep.subr.mxu0 0.0
    %676 = vmatpush2.msra.mxu0 %v577
    %677 = vmatprep.subr.mxu0 0.0
    %678 = vmatpush2.msra.mxu0 %v576
    %679 = vmatprep.subr.mxu0 0.0
    %680 = vmatpush2.msra.mxu0 %v575
    %681 = vmatprep.subr.mxu0 0.0
    %682 = vmatpush2.msra.mxu0 %v574
    %683 = vmatprep.subr.mxu0 0.0
    %684 = vmatpush2.msra.mxu0 %v573
    %685 = vmatprep.subr.mxu0 0.0
    %686 = vmatpush2.msra.mxu0 %v572
    %687 = vmatprep.subr.mxu0 0.0
    %688 = vmatpush2.msra.mxu0 %v571
    %689 = vmatprep.subr.mxu0 0.0
    %690 = vmatpush2.msra.mxu0 %v570
    %691 = vmatprep.subr.mxu0 0.0
    %692 = vmatpush2.msra.mxu0 %v569
    %693 = vmatprep.subr.mxu0 0.0
    %694 = vmatpush2.msra.mxu0 %v568
    %695 = vmatprep.subr.mxu0 0.0
    %696 = vmatpush2.msra.mxu0 %v567
    %697 = vmatprep.subr.mxu0 0.0
    %698 = vmatpush2.msra.mxu0 %v566
    %699 = vmatprep.mubr.f32.mxu0 %v534
    %700 = vmatmul.mubr.f32.gmra.mxu0 %v530
    %v701 = vpop.f32.mrf.mxu0
    %v702 = vadd.f32 %v634, %v701
    %v703 = vpop.f32.mrf.mxu0
    %704 = vmatprep.mubr.f32.mxu0 %v535
    %705 = vmatmul.mubr.f32.gmra.mxu0 %v531
    %v706 = vpop.f32.mrf.mxu0
    %v707 = vadd.f32 %v634, %v706
    %v708 = vpop.f32.mrf.mxu0
    %709 = vdwg.mxu0
    %710 = vmatprep.subr.mxu0 0.0
    %711 = vmatpush1.msra.mxu0 %v597
    %712 = vmatprep.subr.mxu0 0.0
    %713 = vmatpush1.msra.mxu0 %v596
    %714 = vmatprep.subr.mxu0 0.0
    %715 = vmatpush1.msra.mxu0 %v595
    %716 = vmatprep.subr.mxu0 0.0
    %717 = vmatpush1.msra.mxu0 %v594
    %718 = vmatprep.subr.mxu0 0.0
    %719 = vmatpush1.msra.mxu0 %v593
    %720 = vmatprep.subr.mxu0 0.0
    %721 = vmatpush1.msra.mxu0 %v592
    %722 = vmatprep.subr.mxu0 0.0
    %723 = vmatpush1.msra.mxu0 %v591
    %724 = vmatprep.subr.mxu0 0.0
    %725 = vmatpush1.msra.mxu0 %v590
    %726 = vmatprep.subr.mxu0 0.0
    %727 = vmatpush1.msra.mxu0 %v589
    %728 = vmatprep.subr.mxu0 0.0
    %729 = vmatpush1.msra.mxu0 %v588
    %730 = vmatprep.subr.mxu0 0.0
    %731 = vmatpush1.msra.mxu0 %v587
    %732 = vmatprep.subr.mxu0 0.0
    %733 = vmatpush1.msra.mxu0 %v586
    %734 = vmatprep.subr.mxu0 0.0
    %735 = vmatpush1.msra.mxu0 %v585
    %736 = vmatprep.subr.mxu0 0.0
    %737 = vmatpush1.msra.mxu0 %v584
    %738 = vmatprep.subr.mxu0 0.0
    %739 = vmatpush1.msra.mxu0 %v583
    %740 = vmatprep.subr.mxu0 0.0
    %741 = vmatpush1.msra.mxu0 %v582
    %742 = vmatprep.subr.mxu0 0.0
    %743 = vmatpush2.msra.mxu0 %v613
    %744 = vmatprep.subr.mxu0 0.0
    %745 = vmatpush2.msra.mxu0 %v612
    %746 = vmatprep.subr.mxu0 0.0
    %747 = vmatpush2.msra.mxu0 %v611
    %748 = vmatprep.subr.mxu0 0.0
    %749 = vmatpush2.msra.mxu0 %v610
    %750 = vmatprep.subr.mxu0 0.0
    %751 = vmatpush2.msra.mxu0 %v609
    %752 = vmatprep.subr.mxu0 0.0
    %753 = vmatpush2.msra.mxu0 %v608
    %754 = vmatprep.subr.mxu0 0.0
    %755 = vmatpush2.msra.mxu0 %v607
    %756 = vmatprep.subr.mxu0 0.0
    %757 = vmatpush2.msra.mxu0 %v606
    %758 = vmatprep.subr.mxu0 0.0
    %759 = vmatpush2.msra.mxu0 %v605
    %760 = vmatprep.subr.mxu0 0.0
    %761 = vmatpush2.msra.mxu0 %v604
    %762 = vmatprep.subr.mxu0 0.0
    %763 = vmatpush2.msra.mxu0 %v603
    %764 = vmatprep.subr.mxu0 0.0
    %765 = vmatpush2.msra.mxu0 %v602
    %766 = vmatprep.subr.mxu0 0.0
    %767 = vmatpush2.msra.mxu0 %v601
    %768 = vmatprep.subr.mxu0 0.0
    %769 = vmatpush2.msra.mxu0 %v600
    %770 = vmatprep.subr.mxu0 0.0
    %771 = vmatpush2.msra.mxu0 %v599
    %772 = vmatprep.subr.mxu0 0.0
    %773 = vmatpush2.msra.mxu0 %v598
    %774 = vmatprep.mubr.f32.mxu0 %v542
    %775 = vmatmul.mubr.f32.gmra.mxu0 %v538
    %v776 = vpop.f32.mrf.mxu0
    %v777 = vadd.f32 %v702, %v776
    %v778 = vpop.f32.mrf.mxu0
    %779 = vmatprep.mubr.f32.mxu0 %v543
    %780 = vmatmul.mubr.f32.gmra.mxu0 %v539
    %v781 = vpop.f32.mrf.mxu0
    %v782 = vadd.f32 %v707, %v781
    %v783 = vpop.f32.mrf.mxu0
    %784 = vdwg.mxu0
    %785 = vmatprep.subr.mxu0 0.0
    %786 = vmatpush1.msra.mxu0 %v629
    %787 = vmatprep.subr.mxu0 0.0
    %788 = vmatpush1.msra.mxu0 %v628
    %789 = vmatprep.subr.mxu0 0.0
    %790 = vmatpush1.msra.mxu0 %v627
    %791 = vmatprep.subr.mxu0 0.0
    %792 = vmatpush1.msra.mxu0 %v626
    %793 = vmatprep.subr.mxu0 0.0
    %794 = vmatpush1.msra.mxu0 %v625
    %795 = vmatprep.subr.mxu0 0.0
    %796 = vmatpush1.msra.mxu0 %v624
    %797 = vmatprep.subr.mxu0 0.0
    %798 = vmatpush1.msra.mxu0 %v623
    %799 = vmatprep.subr.mxu0 0.0
    %800 = vmatpush1.msra.mxu0 %v622
    %801 = vmatprep.subr.mxu0 0.0
    %802 = vmatpush1.msra.mxu0 %v621
    %803 = vmatprep.subr.mxu0 0.0
    %804 = vmatpush1.msra.mxu0 %v620
    %805 = vmatprep.subr.mxu0 0.0
    %806 = vmatpush1.msra.mxu0 %v619
    %807 = vmatprep.subr.mxu0 0.0
    %808 = vmatpush1.msra.mxu0 %v618
    %809 = vmatprep.subr.mxu0 0.0
    %810 = vmatpush1.msra.mxu0 %v617
    %811 = vmatprep.subr.mxu0 0.0
    %812 = vmatpush1.msra.mxu0 %v616
    %813 = vmatprep.subr.mxu0 0.0
    %814 = vmatpush1.msra.mxu0 %v615
    %815 = vmatprep.subr.mxu0 0.0
    %816 = vmatpush1.msra.mxu0 %v614
    %817 = vmatprep.subr.mxu0 0.0
    %818 = vmatpush2.msra.mxu0 0.0
    %819 = vmatprep.subr.mxu0 0.0
    %820 = vmatpush2.msra.mxu0 0.0
    %821 = vmatprep.subr.mxu0 0.0
    %822 = vmatpush2.msra.mxu0 0.0
    %823 = vmatprep.subr.mxu0 0.0
    %824 = vmatpush2.msra.mxu0 0.0
    %825 = vmatprep.subr.mxu0 0.0
    %826 = vmatpush2.msra.mxu0 0.0
    %827 = vmatprep.subr.mxu0 0.0
    %828 = vmatpush2.msra.mxu0 0.0
    %829 = vmatprep.subr.mxu0 0.0
    %830 = vmatpush2.msra.mxu0 0.0
    %831 = vmatprep.subr.mxu0 0.0
    %832 = vmatpush2.msra.mxu0 0.0
    %833 = vmatprep.subr.mxu0 0.0
    %834 = vmatpush2.msra.mxu0 0.0
    %835 = vmatprep.subr.mxu0 0.0
    %836 = vmatpush2.msra.mxu0 0.0
    %837 = vmatprep.subr.mxu0 0.0
    %838 = vmatpush2.msra.mxu0 0.0
    %839 = vmatprep.subr.mxu0 0.0
    %840 = vmatpush2.msra.mxu0 0.0
    %841 = vmatprep.subr.mxu0 0.0
    %842 = vmatpush2.msra.mxu0 0.0
    %843 = vmatprep.subr.mxu0 0.0
    %844 = vmatpush2.msra.mxu0 0.0
    %845 = vmatprep.subr.mxu0 0.0
    %846 = vmatpush2.msra.mxu0 0.0
    %847 = vmatprep.subr.mxu0 0.0
    %848 = vmatpush2.msra.mxu0 0.0
    %849 = vmatprep.mubr.f32.mxu0 0.0
    %850 = vmatmul.mubr.f32.gmra.mxu0 %v546
    %v851 = vpop.f32.mrf.mxu0
    %v852 = vadd.f32 %v777, %v851
    %v853 = vpop.f32.mrf.mxu0
    %854 = vmatprep.mubr.f32.mxu0 0.0
    %855 = vmatmul.mubr.f32.gmra.mxu0 %v547
    %v856 = vpop.f32.mrf.mxu0
    %v857 = vadd.f32 %v782, %v856
    %v858 = vpop.f32.mrf.mxu0
    %859 = vdwg.mxu0
    %v860 = vmax.f32 %v852, 0.0
    %v861 = vmax.f32 %v857, 0.0
    %v862 = vld [vmem:[%s1] sm:$0xff]
    %v863 = vld [vmem:[%s1 + $0x8] sm:$0xff]
    %v864 = vld [vmem:[%s1 + $0x10] sm:$0xff]
    %v865 = vld [vmem:[%s1 + $0x18] sm:$0xff]
    %v866 = vld [vmem:[%s1 + $0x20] sm:$0xff]
    %v867 = vld [vmem:[%s1 + $0x28] sm:$0xff]
    %v868 = vld [vmem:[%s1 + $0x30] sm:$0xff]
    %v869 = vld [vmem:[%s1 + $0x38] sm:$0xff]
    %v870 = vld [vmem:[%s1 + $0x40] sm:$0xff]
    %v871 = vld [vmem:[%s1 + $0x48] sm:$0xff]
    %v872 = vld [vmem:[%s1 + $0x50] sm:$0xff]
    %v873 = vld [vmem:[%s1 + $0x58] sm:$0xff]
    %v874 = vld [vmem:[%s1 + $0x60] sm:$0xff]
    %v875 = vld [vmem:[%s1 + $0x68] sm:$0xff]
    %v876 = vld [vmem:[%s1 + $0x70] sm:$0xff]
    %v877 = vld [vmem:[%s1 + $0x78] sm:$0xff]
    %v878 = vld [vmem:[%s1 + $0x80] sm:$0xff]
    %v879 = vld [vmem:[%s1 + $0x88] sm:$0xff]
    %v880 = vld [vmem:[%s1 + $0x90] sm:$0xff]
    %v881 = vld [vmem:[%s1 + $0x98] sm:$0xff]
    %v882 = vld [vmem:[%s1 + $0xa0] sm:$0xff]
    %v883 = vld [vmem:[%s1 + $0xa8] sm:$0xff]
    %v884 = vld [vmem:[%s1 + $0xb0] sm:$0xff]
    %v885 = vld [vmem:[%s1 + $0xb8] sm:$0xff]
    %v886 = vld [vmem:[%s1 + $0xc0] sm:$0xff]
    %v887 = vld [vmem:[%s1 + $0xc8] sm:$0xff]
    %v888 = vld [vmem:[%s1 + $0xd0] sm:$0xff]
    %v889 = vld [vmem:[%s1 + $0xd8] sm:$0xff]
    %v890 = vld [vmem:[%s1 + $0xe0] sm:$0xff]
    %v891 = vld [vmem:[%s1 + $0xe8] sm:$0xff]
    %v892 = vld [vmem:[%s1 + $0xf0] sm:$0xff]
    %v893 = vld [vmem:[%s1 + $0xf8] sm:$0xff]
    %v894 = vld [vmem:[%s1 + $0x100] sm:$0xff]
    %v895 = vld [vmem:[%s1 + $0x108] sm:$0xff]
    %v896 = vld [vmem:[%s1 + $0x110] sm:$0xff]
    %v897 = vld [vmem:[%s1 + $0x118] sm:$0xff]
    %v898 = vld [vmem:[%s1 + $0x120] sm:$0xff]
    %v899 = vld [vmem:[%s1 + $0x128] sm:$0xff]
    %v900 = vld [vmem:[%s1 + $0x130] sm:$0xff]
    %v901 = vld [vmem:[%s1 + $0x138] sm:$0xff]
    %v902 = vld [vmem:[%s1 + $0x140] sm:$0xff]
    %v903 = vld [vmem:[%s1 + $0x148] sm:$0xff]
    %v904 = vld [vmem:[%s1 + $0x150] sm:$0xff]
    %v905 = vld [vmem:[%s1 + $0x158] sm:$0xff]
    %v906 = vld [vmem:[%s1 + $0x160] sm:$0xff]
    %v907 = vld [vmem:[%s1 + $0x168] sm:$0xff]
    %v908 = vld [vmem:[%s1 + $0x170] sm:$0xff]
    %v909 = vld [vmem:[%s1 + $0x178] sm:$0xff]
    %v910 = vld [vmem:[%s1 + $0x180] sm:$0xff]
    %v911 = vld [vmem:[%s1 + $0x188] sm:$0xff]
    %v912 = vld [vmem:[%s1 + $0x190] sm:$0xff]
    %v913 = vld [vmem:[%s1 + $0x198] sm:$0xff]
    %v914 = vld [vmem:[%s1 + $0x1a0] sm:$0xff]
    %v915 = vld [vmem:[%s1 + $0x1a8] sm:$0xff]
    %v916 = vld [vmem:[%s1 + $0x1b0] sm:$0xff]
    %v917 = vld [vmem:[%s1 + $0x1b8] sm:$0xff]
    %v918 = vld [vmem:[%s1 + $0x1c0] sm:$0xff]
    %v919 = vld [vmem:[%s1 + $0x1c8] sm:$0xff]
    %v920 = vld [vmem:[%s1 + $0x1d0] sm:$0xff]
    %v921 = vld [vmem:[%s1 + $0x1d8] sm:$0xff]
    %v922 = vld [vmem:[%s1 + $0x1e0] sm:$0xff]
    %v923 = vld [vmem:[%s1 + $0x1e8] sm:$0xff]
    %v924 = vld [vmem:[%s1 + $0x1f0] sm:$0xff]
    %v925 = vld [vmem:[%s1 + $0x1f8] sm:$0xff]
    %v926 = vld [vmem:[%s1 + $0x200] sm:$0xff]
    %v927 = vld [vmem:[%s1 + $0x208] sm:$0xff]
    %v928 = vld [vmem:[%s1 + $0x210] sm:$0xff]
    %v929 = vld [vmem:[%s1 + $0x218] sm:$0xff]
    %v930 = vld [vmem:[%s1 + $0x220] sm:$0xff]
    %v931 = vld [vmem:[%s1 + $0x228] sm:$0xff]
    %v932 = vld [vmem:[%s1 + $0x230] sm:$0xff]
    %v933 = vld [vmem:[%s1 + $0x238] sm:$0xff]
    %v934 = vld [vmem:[%s1 + $0x240] sm:$0xff]
    %v935 = vld [vmem:[%s1 + $0x248] sm:$0xff]
    %v936 = vld [vmem:[%s1 + $0x250] sm:$0xff]
    %v937 = vld [vmem:[%s1 + $0x258] sm:$0xff]
    %v938 = vld [vmem:[%s1 + $0x260] sm:$0xff]
    %v939 = vld [vmem:[%s1 + $0x268] sm:$0xff]
    %v940 = vld [vmem:[%s1 + $0x270] sm:$0xff]
    %v941 = vld [vmem:[%s1 + $0x278] sm:$0xff]
    %v942 = vld [vmem:[%s1 + $0x280] sm:$0xff]
    %v943 = vld [vmem:[%s1 + $0x288] sm:$0xff]
    %v944 = vld [vmem:[%s1 + $0x290] sm:$0xff]
    %v945 = vld [vmem:[%s1 + $0x298] sm:$0xff]
    %v946 = vld [vmem:[%s1 + $0x2a0] sm:$0xff]
    %v947 = vld [vmem:[%s1 + $0x2a8] sm:$0xff]
    %v948 = vld [vmem:[%s1 + $0x2b0] sm:$0xff]
    %v949 = vld [vmem:[%s1 + $0x2b8] sm:$0xff]
    %v950 = vld [vmem:[%s1 + $0x2c0] sm:$0xff]
    %v951 = vld [vmem:[%s1 + $0x2c8] sm:$0xff]
    %v952 = vld [vmem:[%s1 + $0x2d0] sm:$0xff]
    %v953 = vld [vmem:[%s1 + $0x2d8] sm:$0xff]
    %v954 = vld [vmem:[%s1 + $0x2e0] sm:$0xff]
    %v955 = vld [vmem:[%s1 + $0x2e8] sm:$0xff]
    %v956 = vld [vmem:[%s1 + $0x2f0] sm:$0xff]
    %v957 = vld [vmem:[%s1 + $0x2f8] sm:$0xff]
    %v958 = vld [vmem:[%s1 + $0x300] sm:$0xff]
    %v959 = vld [vmem:[%s1 + $0x308] sm:$0xff]
    %v960 = vld [vmem:[%s1 + $0x310] sm:$0xff]
    %v961 = vld [vmem:[%s1 + $0x318] sm:$0xff]
    %v962 = vld [vmem:[%s1 + $0x320] sm:$0xff]
    %v963 = vld [vmem:[%s1 + $0x328] sm:$0xff]
    %v964 = vld [vmem:[%s1 + $0x330] sm:$0xff]
    %v965 = vld [vmem:[%s1 + $0x338] sm:$0xff]
    %v966 = vld [vmem:[%s1 + $0x340] sm:$0xff]
    %v967 = vld [vmem:[%s1 + $0x348] sm:$0xff]
    %v968 = vld [vmem:[%s1 + $0x350] sm:$0xff]
    %v969 = vld [vmem:[%s1 + $0x358] sm:$0xff]
    %v970 = vld [vmem:[%s1 + $0x360] sm:$0xff]
    %v971 = vld [vmem:[%s1 + $0x368] sm:$0xff]
    %v972 = vld [vmem:[%s1 + $0x370] sm:$0xff]
    %v973 = vld [vmem:[%s1 + $0x378] sm:$0xff]
    %v974 = vld [vmem:[%s1 + $0x380] sm:$0xff]
    %v975 = vld [vmem:[%s1 + $0x388] sm:$0xff]
    %v976 = vld [vmem:[%s1 + $0x390] sm:$0xff]
    %v977 = vld [vmem:[%s1 + $0x398] sm:$0xff]
    %v978 = vld [vmem:[%s1 + $0x3a0] sm:$0xff]
    %v979 = vld [vmem:[%s1 + $0x3a8] sm:$0xff]
    %v980 = vld [vmem:[%s1 + $0x3b0] sm:$0xff]
    %v981 = vld [vmem:[%s1 + $0x3b8] sm:$0xff]
    %v982 = vld [vmem:[%s1 + $0x3c0] sm:$0xff]
    %v983 = vld [vmem:[%s1 + $0x3c8] sm:$0xff]
    %v984 = vld [vmem:[%s1 + $0x3d0] sm:$0xff]
    %v985 = vld [vmem:[%s1 + $0x3d8] sm:$0xff]
    %v986 = vld [vmem:[%s1 + $0x3e0] sm:$0xff]
    %v987 = vld [vmem:[%s1 + $0x3e8] sm:$0xff]
    %v988 = vld [vmem:[%s1 + $0x3f0] sm:$0xff]
    %v989 = vld [vmem:[%s1 + $0x3f8] sm:$0xff]
    %v990 = vld [vmem:[%s2 + $0x22] sm:$0x1]
    %v991 = vlaneseq
    %v992 = vshrl.u32 %v991, 7
    %v993 = vsub.s32 0, %v992
    %v994 = vrot.slane %v990, %v993
    %v997 = vcombine.low %v860, %v861
    %v998 = vcombine.high %v860, %v861
    %v1000 = vunpack.c.l.s4 1966171168
    %v1001 = vunpack.c.0.s8 %v1000
    %v1002 = vlaneseq
    %v1003 = vshrl.u32 %v1002, 7
    %v1004 = vsub.s32 %v1001, %v1003
    %v1005 = vrot.slane %v997, %v1004
    %v1007 = vunpack.c.l.s4 1966171168
    %v1008 = vunpack.c.0.s8 %v1007
    %v1009 = vlaneseq
    %v1010 = vshrl.u32 %v1009, 7
    %v1011 = vsub.s32 %v1008, %v1010
    %v1012 = vrot.slane %v998, %v1011
    %v1013 = vcombine.high %v1005, %v1005
    %v1014 = vcombine.high %v1012, %v1012
    %v1016 = vunpack.c.l.s4 1966171168
    %v1017 = vunpack.c.0.s8 %v1016
    %v1018 = vlaneseq
    %v1019 = vshrl.u32 %v1018, 7
    %v1020 = vsub.s32 %v1017, %v1019
    %v1021 = vrot.slane %v1005, %v1020
    %v1023 = vunpack.c.l.s4 1966171168
    %v1024 = vunpack.c.0.s8 %v1023
    %v1025 = vlaneseq
    %v1026 = vshrl.u32 %v1025, 7
    %v1027 = vsub.s32 %v1024, %v1026
    %v1028 = vrot.slane %v1012, %v1027
    %v1030 = vunpack.c.l.s4 1966171168
    %v1031 = vunpack.c.0.s8 %v1030
    %v1032 = vlaneseq
    %v1033 = vshrl.u32 %v1032, 7
    %v1034 = vsub.s32 %v1031, %v1033
    %v1035 = vrot.slane %v1013, %v1034
    %v1037 = vunpack.c.l.s4 1966171168
    %v1038 = vunpack.c.0.s8 %v1037
    %v1039 = vlaneseq
    %v1040 = vshrl.u32 %v1039, 7
    %v1041 = vsub.s32 %v1038, %v1040
    %v1042 = vrot.slane %v1014, %v1041
    %v1043 = vcombine.high %v1021, %v1021
    %v1044 = vcombine.high %v1028, %v1028
    %v1045 = vcombine.high %v1035, %v1035
    %v1046 = vcombine.high %v1042, %v1042
    %1055 = vmatprep.subr.mxu0 0.0
    %1056 = vmatpush1.msra.mxu0 %v877
    %1057 = vmatprep.subr.mxu0 0.0
    %1058 = vmatpush1.msra.mxu0 %v876
    %1059 = vmatprep.subr.mxu0 0.0
    %1060 = vmatpush1.msra.mxu0 %v875
    %1061 = vmatprep.subr.mxu0 0.0
    %1062 = vmatpush1.msra.mxu0 %v874
    %1063 = vmatprep.subr.mxu0 0.0
    %1064 = vmatpush1.msra.mxu0 %v873
    %1065 = vmatprep.subr.mxu0 0.0
    %1066 = vmatpush1.msra.mxu0 %v872
    %1067 = vmatprep.subr.mxu0 0.0
    %1068 = vmatpush1.msra.mxu0 %v871
    %1069 = vmatprep.subr.mxu0 0.0
    %1070 = vmatpush1.msra.mxu0 %v870
    %1071 = vmatprep.subr.mxu0 0.0
    %1072 = vmatpush1.msra.mxu0 %v869
    %1073 = vmatprep.subr.mxu0 0.0
    %1074 = vmatpush1.msra.mxu0 %v868
    %1075 = vmatprep.subr.mxu0 0.0
    %1076 = vmatpush1.msra.mxu0 %v867
    %1077 = vmatprep.subr.mxu0 0.0
    %1078 = vmatpush1.msra.mxu0 %v866
    %1079 = vmatprep.subr.mxu0 0.0
    %1080 = vmatpush1.msra.mxu0 %v865
    %1081 = vmatprep.subr.mxu0 0.0
    %1082 = vmatpush1.msra.mxu0 %v864
    %1083 = vmatprep.subr.mxu0 0.0
    %1084 = vmatpush1.msra.mxu0 %v863
    %1085 = vmatprep.subr.mxu0 0.0
    %1086 = vmatpush1.msra.mxu0 %v862
    %1087 = vmatprep.subr.mxu0 0.0
    %1088 = vmatpush2.msra.mxu0 %v893
    %1089 = vmatprep.subr.mxu0 0.0
    %1090 = vmatpush2.msra.mxu0 %v892
    %1091 = vmatprep.subr.mxu0 0.0
    %1092 = vmatpush2.msra.mxu0 %v891
    %1093 = vmatprep.subr.mxu0 0.0
    %1094 = vmatpush2.msra.mxu0 %v890
    %1095 = vmatprep.subr.mxu0 0.0
    %1096 = vmatpush2.msra.mxu0 %v889
    %1097 = vmatprep.subr.mxu0 0.0
    %1098 = vmatpush2.msra.mxu0 %v888
    %1099 = vmatprep.subr.mxu0 0.0
    %1100 = vmatpush2.msra.mxu0 %v887
    %1101 = vmatprep.subr.mxu0 0.0
    %1102 = vmatpush2.msra.mxu0 %v886
    %1103 = vmatprep.subr.mxu0 0.0
    %1104 = vmatpush2.msra.mxu0 %v885
    %1105 = vmatprep.subr.mxu0 0.0
    %1106 = vmatpush2.msra.mxu0 %v884
    %1107 = vmatprep.subr.mxu0 0.0
    %1108 = vmatpush2.msra.mxu0 %v883
    %1109 = vmatprep.subr.mxu0 0.0
    %1110 = vmatpush2.msra.mxu0 %v882
    %1111 = vmatprep.subr.mxu0 0.0
    %1112 = vmatpush2.msra.mxu0 %v881
    %1113 = vmatprep.subr.mxu0 0.0
    %1114 = vmatpush2.msra.mxu0 %v880
    %1115 = vmatprep.subr.mxu0 0.0
    %1116 = vmatpush2.msra.mxu0 %v879
    %1117 = vmatprep.subr.mxu0 0.0
    %1118 = vmatpush2.msra.mxu0 %v878
    %1119 = vmatprep.mubr.f32.mxu0 %v1035
    %1120 = vmatmul.mubr.f32.gmra.mxu0 %v1021
    %v1121 = vpop.f32.mrf.mxu0
    %v1122 = vadd.f32 %v994, %v1121
    %v1123 = vpop.f32.mrf.mxu0
    %1124 = vdwg.mxu0
    %1125 = vmatprep.subr.mxu0 0.0
    %1126 = vmatpush1.msra.mxu0 %v909
    %1127 = vmatprep.subr.mxu0 0.0
    %1128 = vmatpush1.msra.mxu0 %v908
    %1129 = vmatprep.subr.mxu0 0.0
    %1130 = vmatpush1.msra.mxu0 %v907
    %1131 = vmatprep.subr.mxu0 0.0
    %1132 = vmatpush1.msra.mxu0 %v906
    %1133 = vmatprep.subr.mxu0 0.0
    %1134 = vmatpush1.msra.mxu0 %v905
    %1135 = vmatprep.subr.mxu0 0.0
    %1136 = vmatpush1.msra.mxu0 %v904
    %1137 = vmatprep.subr.mxu0 0.0
    %1138 = vmatpush1.msra.mxu0 %v903
    %1139 = vmatprep.subr.mxu0 0.0
    %1140 = vmatpush1.msra.mxu0 %v902
    %1141 = vmatprep.subr.mxu0 0.0
    %1142 = vmatpush1.msra.mxu0 %v901
    %1143 = vmatprep.subr.mxu0 0.0
    %1144 = vmatpush1.msra.mxu0 %v900
    %1145 = vmatprep.subr.mxu0 0.0
    %1146 = vmatpush1.msra.mxu0 %v899
    %1147 = vmatprep.subr.mxu0 0.0
    %1148 = vmatpush1.msra.mxu0 %v898
    %1149 = vmatprep.subr.mxu0 0.0
    %1150 = vmatpush1.msra.mxu0 %v897
    %1151 = vmatprep.subr.mxu0 0.0
    %1152 = vmatpush1.msra.mxu0 %v896
    %1153 = vmatprep.subr.mxu0 0.0
    %1154 = vmatpush1.msra.mxu0 %v895
    %1155 = vmatprep.subr.mxu0 0.0
    %1156 = vmatpush1.msra.mxu0 %v894
    %1157 = vmatprep.subr.mxu0 0.0
    %1158 = vmatpush2.msra.mxu0 %v925
    %1159 = vmatprep.subr.mxu0 0.0
    %1160 = vmatpush2.msra.mxu0 %v924
    %1161 = vmatprep.subr.mxu0 0.0
    %1162 = vmatpush2.msra.mxu0 %v923
    %1163 = vmatprep.subr.mxu0 0.0
    %1164 = vmatpush2.msra.mxu0 %v922
    %1165 = vmatprep.subr.mxu0 0.0
    %1166 = vmatpush2.msra.mxu0 %v921
    %1167 = vmatprep.subr.mxu0 0.0
    %1168 = vmatpush2.msra.mxu0 %v920
    %1169 = vmatprep.subr.mxu0 0.0
    %1170 = vmatpush2.msra.mxu0 %v919
    %1171 = vmatprep.subr.mxu0 0.0
    %1172 = vmatpush2.msra.mxu0 %v918
    %1173 = vmatprep.subr.mxu0 0.0
    %1174 = vmatpush2.msra.mxu0 %v917
    %1175 = vmatprep.subr.mxu0 0.0
    %1176 = vmatpush2.msra.mxu0 %v916
    %1177 = vmatprep.subr.mxu0 0.0
    %1178 = vmatpush2.msra.mxu0 %v915
    %1179 = vmatprep.subr.mxu0 0.0
    %1180 = vmatpush2.msra.mxu0 %v914
    %1181 = vmatprep.subr.mxu0 0.0
    %1182 = vmatpush2.msra.mxu0 %v913
    %1183 = vmatprep.subr.mxu0 0.0
    %1184 = vmatpush2.msra.mxu0 %v912
    %1185 = vmatprep.subr.mxu0 0.0
    %1186 = vmatpush2.msra.mxu0 %v911
    %1187 = vmatprep.subr.mxu0 0.0
    %1188 = vmatpush2.msra.mxu0 %v910
    %1189 = vmatprep.mubr.f32.mxu0 %v1045
    %1190 = vmatmul.mubr.f32.gmra.mxu0 %v1043
    %v1191 = vpop.f32.mrf.mxu0
    %v1192 = vadd.f32 %v1122, %v1191
    %v1193 = vpop.f32.mrf.mxu0
    %1194 = vdwg.mxu0
    %1195 = vmatprep.subr.mxu0 0.0
    %1196 = vmatpush1.msra.mxu0 %v941
    %1197 = vmatprep.subr.mxu0 0.0
    %1198 = vmatpush1.msra.mxu0 %v940
    %1199 = vmatprep.subr.mxu0 0.0
    %1200 = vmatpush1.msra.mxu0 %v939
    %1201 = vmatprep.subr.mxu0 0.0
    %1202 = vmatpush1.msra.mxu0 %v938
    %1203 = vmatprep.subr.mxu0 0.0
    %1204 = vmatpush1.msra.mxu0 %v937
    %1205 = vmatprep.subr.mxu0 0.0
    %1206 = vmatpush1.msra.mxu0 %v936
    %1207 = vmatprep.subr.mxu0 0.0
    %1208 = vmatpush1.msra.mxu0 %v935
    %1209 = vmatprep.subr.mxu0 0.0
    %1210 = vmatpush1.msra.mxu0 %v934
    %1211 = vmatprep.subr.mxu0 0.0
    %1212 = vmatpush1.msra.mxu0 %v933
    %1213 = vmatprep.subr.mxu0 0.0
    %1214 = vmatpush1.msra.mxu0 %v932
    %1215 = vmatprep.subr.mxu0 0.0
    %1216 = vmatpush1.msra.mxu0 %v931
    %1217 = vmatprep.subr.mxu0 0.0
    %1218 = vmatpush1.msra.mxu0 %v930
    %1219 = vmatprep.subr.mxu0 0.0
    %1220 = vmatpush1.msra.mxu0 %v929
    %1221 = vmatprep.subr.mxu0 0.0
    %1222 = vmatpush1.msra.mxu0 %v928
    %1223 = vmatprep.subr.mxu0 0.0
    %1224 = vmatpush1.msra.mxu0 %v927
    %1225 = vmatprep.subr.mxu0 0.0
    %1226 = vmatpush1.msra.mxu0 %v926
    %1227 = vmatprep.subr.mxu0 0.0
    %1228 = vmatpush2.msra.mxu0 %v957
    %1229 = vmatprep.subr.mxu0 0.0
    %1230 = vmatpush2.msra.mxu0 %v956
    %1231 = vmatprep.subr.mxu0 0.0
    %1232 = vmatpush2.msra.mxu0 %v955
    %1233 = vmatprep.subr.mxu0 0.0
    %1234 = vmatpush2.msra.mxu0 %v954
    %1235 = vmatprep.subr.mxu0 0.0
    %1236 = vmatpush2.msra.mxu0 %v953
    %1237 = vmatprep.subr.mxu0 0.0
    %1238 = vmatpush2.msra.mxu0 %v952
    %1239 = vmatprep.subr.mxu0 0.0
    %1240 = vmatpush2.msra.mxu0 %v951
    %1241 = vmatprep.subr.mxu0 0.0
    %1242 = vmatpush2.msra.mxu0 %v950
    %1243 = vmatprep.subr.mxu0 0.0
    %1244 = vmatpush2.msra.mxu0 %v949
    %1245 = vmatprep.subr.mxu0 0.0
    %1246 = vmatpush2.msra.mxu0 %v948
    %1247 = vmatprep.subr.mxu0 0.0
    %1248 = vmatpush2.msra.mxu0 %v947
    %1249 = vmatprep.subr.mxu0 0.0
    %1250 = vmatpush2.msra.mxu0 %v946
    %1251 = vmatprep.subr.mxu0 0.0
    %1252 = vmatpush2.msra.mxu0 %v945
    %1253 = vmatprep.subr.mxu0 0.0
    %1254 = vmatpush2.msra.mxu0 %v944
    %1255 = vmatprep.subr.mxu0 0.0
    %1256 = vmatpush2.msra.mxu0 %v943
    %1257 = vmatprep.subr.mxu0 0.0
    %1258 = vmatpush2.msra.mxu0 %v942
    %1259 = vmatprep.mubr.f32.mxu0 %v1042
    %1260 = vmatmul.mubr.f32.gmra.mxu0 %v1028
    %v1261 = vpop.f32.mrf.mxu0
    %v1262 = vadd.f32 %v1192, %v1261
    %v1263 = vpop.f32.mrf.mxu0
    %1264 = vdwg.mxu0
    %1265 = vmatprep.subr.mxu0 0.0
    %1266 = vmatpush1.msra.mxu0 %v973
    %1267 = vmatprep.subr.mxu0 0.0
    %1268 = vmatpush1.msra.mxu0 %v972
    %1269 = vmatprep.subr.mxu0 0.0
    %1270 = vmatpush1.msra.mxu0 %v971
    %1271 = vmatprep.subr.mxu0 0.0
    %1272 = vmatpush1.msra.mxu0 %v970
    %1273 = vmatprep.subr.mxu0 0.0
    %1274 = vmatpush1.msra.mxu0 %v969
    %1275 = vmatprep.subr.mxu0 0.0
    %1276 = vmatpush1.msra.mxu0 %v968
    %1277 = vmatprep.subr.mxu0 0.0
    %1278 = vmatpush1.msra.mxu0 %v967
    %1279 = vmatprep.subr.mxu0 0.0
    %1280 = vmatpush1.msra.mxu0 %v966
    %1281 = vmatprep.subr.mxu0 0.0
    %1282 = vmatpush1.msra.mxu0 %v965
    %1283 = vmatprep.subr.mxu0 0.0
    %1284 = vmatpush1.msra.mxu0 %v964
    %1285 = vmatprep.subr.mxu0 0.0
    %1286 = vmatpush1.msra.mxu0 %v963
    %1287 = vmatprep.subr.mxu0 0.0
    %1288 = vmatpush1.msra.mxu0 %v962
    %1289 = vmatprep.subr.mxu0 0.0
    %1290 = vmatpush1.msra.mxu0 %v961
    %1291 = vmatprep.subr.mxu0 0.0
    %1292 = vmatpush1.msra.mxu0 %v960
    %1293 = vmatprep.subr.mxu0 0.0
    %1294 = vmatpush1.msra.mxu0 %v959
    %1295 = vmatprep.subr.mxu0 0.0
    %1296 = vmatpush1.msra.mxu0 %v958
    %1297 = vmatprep.subr.mxu0 0.0
    %1298 = vmatpush2.msra.mxu0 %v989
    %1299 = vmatprep.subr.mxu0 0.0
    %1300 = vmatpush2.msra.mxu0 %v988
    %1301 = vmatprep.subr.mxu0 0.0
    %1302 = vmatpush2.msra.mxu0 %v987
    %1303 = vmatprep.subr.mxu0 0.0
    %1304 = vmatpush2.msra.mxu0 %v986
    %1305 = vmatprep.subr.mxu0 0.0
    %1306 = vmatpush2.msra.mxu0 %v985
    %1307 = vmatprep.subr.mxu0 0.0
    %1308 = vmatpush2.msra.mxu0 %v984
    %1309 = vmatprep.subr.mxu0 0.0
    %1310 = vmatpush2.msra.mxu0 %v983
    %1311 = vmatprep.subr.mxu0 0.0
    %1312 = vmatpush2.msra.mxu0 %v982
    %1313 = vmatprep.subr.mxu0 0.0
    %1314 = vmatpush2.msra.mxu0 %v981
    %1315 = vmatprep.subr.mxu0 0.0
    %1316 = vmatpush2.msra.mxu0 %v980
    %1317 = vmatprep.subr.mxu0 0.0
    %1318 = vmatpush2.msra.mxu0 %v979
    %1319 = vmatprep.subr.mxu0 0.0
    %1320 = vmatpush2.msra.mxu0 %v978
    %1321 = vmatprep.subr.mxu0 0.0
    %1322 = vmatpush2.msra.mxu0 %v977
    %1323 = vmatprep.subr.mxu0 0.0
    %1324 = vmatpush2.msra.mxu0 %v976
    %1325 = vmatprep.subr.mxu0 0.0
    %1326 = vmatpush2.msra.mxu0 %v975
    %1327 = vmatprep.subr.mxu0 0.0
    %1328 = vmatpush2.msra.mxu0 %v974
    %1329 = vmatprep.mubr.f32.mxu0 %v1046
    %1330 = vmatmul.mubr.f32.gmra.mxu0 %v1044
    %v1331 = vpop.f32.mrf.mxu0
    %v1332 = vadd.f32 %v1262, %v1331
    %v1333 = vpop.f32.mrf.mxu0
    %1334 = vdwg.mxu0
    %v1335 = vmax.f32 %v1332, 0.0
    %v1336 = vld [vmem:[%s2] sm:$0xff]
    %v1337 = vld [vmem:[%s2 + $0x8] sm:$0xff]
    %v1338 = vld [vmem:[%s2 + $0x10] sm:$0xff]
    %v1339 = vld [vmem:[%s2 + $0x18] sm:$0xff]
    %v1340 = vld [vmem:[%s2 + $0x23] sm:$0x1]
    %v1341 = vlaneseq
    %v1342 = vshrl.u32 %v1341, 7
    %v1343 = vsub.s32 0, %v1342
    %v1344 = vrot.slane %v1340, %v1343
    %vm1345 = vcmask 261120
    %v1347 = vsel %vm1345, %v1335, 0
    %1349 = vmatprep.subr.mxu0 0.0
    %1350 = vmatpush1.msra.mxu0 0.0
    %1351 = vmatprep.subr.mxu0 0.0
    %1352 = vmatpush1.msra.mxu0 0.0
    %1353 = vmatprep.subr.mxu0 0.0
    %1354 = vmatpush1.msra.mxu0 0.0
    %1355 = vmatprep.subr.mxu0 0.0
    %1356 = vmatpush1.msra.mxu0 0.0
    %1357 = vmatprep.subr.mxu0 0.0
    %1358 = vmatpush1.msra.mxu0 0.0
    %1359 = vmatprep.subr.mxu0 0.0
    %1360 = vmatpush1.msra.mxu0 0.0
    %1361 = vmatprep.subr.mxu0 0.0
    %1362 = vmatpush1.msra.mxu0 0.0
    %1363 = vmatprep.subr.mxu0 0.0
    %1364 = vmatpush1.msra.mxu0 0.0
    %1365 = vmatprep.subr.mxu0 0.0
    %1366 = vmatpush1.msra.mxu0 0.0
    %1367 = vmatprep.subr.mxu0 0.0
    %1368 = vmatpush1.msra.mxu0 0.0
    %1369 = vmatprep.subr.mxu0 0.0
    %1370 = vmatpush1.msra.mxu0 0.0
    %1371 = vmatprep.subr.mxu0 0.0
    %1372 = vmatpush1.msra.mxu0 0.0
    %1373 = vmatprep.subr.mxu0 0.0
    %1374 = vmatpush1.msra.mxu0 %v1339
    %1375 = vmatprep.subr.mxu0 0.0
    %1376 = vmatpush1.msra.mxu0 %v1338
    %1377 = vmatprep.subr.mxu0 0.0
    %1378 = vmatpush1.msra.mxu0 %v1337
    %1379 = vmatprep.subr.mxu0 0.0
    %1380 = vmatpush1.msra.mxu0 %v1336
    %1381 = vmatprep.subr.mxu0 0.0
    %1382 = vmatpush2.msra.mxu0 0.0
    %1383 = vmatprep.subr.mxu0 0.0
    %1384 = vmatpush2.msra.mxu0 0.0
    %1385 = vmatprep.subr.mxu0 0.0
    %1386 = vmatpush2.msra.mxu0 0.0
    %1387 = vmatprep.subr.mxu0 0.0
    %1388 = vmatpush2.msra.mxu0 0.0
    %1389 = vmatprep.subr.mxu0 0.0
    %1390 = vmatpush2.msra.mxu0 0.0
    %1391 = vmatprep.subr.mxu0 0.0
    %1392 = vmatpush2.msra.mxu0 0.0
    %1393 = vmatprep.subr.mxu0 0.0
    %1394 = vmatpush2.msra.mxu0 0.0
    %1395 = vmatprep.subr.mxu0 0.0
    %1396 = vmatpush2.msra.mxu0 0.0
    %1397 = vmatprep.subr.mxu0 0.0
    %1398 = vmatpush2.msra.mxu0 0.0
    %1399 = vmatprep.subr.mxu0 0.0
    %1400 = vmatpush2.msra.mxu0 0.0
    %1401 = vmatprep.subr.mxu0 0.0
    %1402 = vmatpush2.msra.mxu0 0.0
    %1403 = vmatprep.subr.mxu0 0.0
    %1404 = vmatpush2.msra.mxu0 0.0
    %1405 = vmatprep.subr.mxu0 0.0
    %1406 = vmatpush2.msra.mxu0 0.0
    %1407 = vmatprep.subr.mxu0 0.0
    %1408 = vmatpush2.msra.mxu0 0.0
    %1409 = vmatprep.subr.mxu0 0.0
    %1410 = vmatpush2.msra.mxu0 0.0
    %1411 = vmatprep.subr.mxu0 0.0
    %1412 = vmatpush2.msra.mxu0 0.0
    %1413 = vmatprep.mubr.f32.mxu0 0.0
    %1414 = vmatmul.mubr.f32.gmra.mxu0 %v1347
    %v1415 = vpop.f32.mrf.mxu0
    %v1416 = vadd.f32 %v1344, %v1415
    %v1417 = vpop.f32.mrf.mxu0
    %1418 = vdwg.mxu0
    %vm1419 = vcmask 58368
    %1420 = vst.msk [vmem:[#allocation7] sm:$0x3] %vm1419, %v1416
    %1422 = vrot.lane.b32.xlu0 %v1416, 120
    %v1423 = vpop.permute.xlu0 %1422
    %1425 = vst.msk [vmem:[#allocation9] sm:$0x3] %vm1419, %v1423
    // Predicated region
    $region18: #{model_forward.2} parent=1 // pred_check
      _
    $region19: #{model_forward.2} parent=1 // pred_check_branch
      %1427 = sbr.rel (0) target = $region21
    $region20: #{model_forward.2} parent=1 // pred_region
      %s1429 = ssub.s32 32, 32
      %1430 = vsyncadd [#allocation8], %s1429
      %s1432 = sshll.u32 [#allocation7], 4
      %s1433 = int_to_ptr.vmem [resolvable:$true] %s1432
      %1435 = dma.vmem_to_hbm [thread:$0]  %s1433, 32, %s5, [#allocation8]
    $region21: #{model_forward.2} parent=1 // pred_fallthru
      _
    // Predicated region
    $region22: #{model_forward.2} parent=1 // pred_check
      _
    $region23: #{model_forward.2} parent=1 // pred_check_branch
      %1437 = sbr.rel (0) target = $region25
    $region24: #{model_forward.2} parent=1 // pred_region
      %s1439 = ssub.s32 32, 32
      %1440 = vsyncadd [#allocation10], %s1439
      %s1442 = sshll.u32 [#allocation9], 4
      %s1443 = int_to_ptr.vmem [resolvable:$true] %s1442
      %1445 = dma.vmem_to_hbm [thread:$0]  %s1443, 32, %s6, [#allocation10]
    $region25: #{model_forward.2} parent=1 // pred_fallthru
      _
    // Predicated region
    $region26: #{model_forward.2} parent=1 // pred_check
      _
    $region27: #{model_forward.2} parent=1 // pred_check_branch
      %1447 = sbr.rel (0) target = $region29
    $region28: #{model_forward.2} parent=1 // pred_region
      %1448 = dma.done [#allocation8], 32
    $region29: #{model_forward.2} parent=1 // pred_fallthru
      _
    // Predicated region
    $region30: #{model_forward.2} parent=1 // pred_check
      _
    $region31: #{model_forward.2} parent=1 // pred_check_branch
      %1450 = sbr.rel (0) target = $region33
    $region32: #{model_forward.2} parent=1 // pred_region
      %1451 = dma.done [#allocation10], 32
    $region33: #{model_forward.2} parent=1 // pred_fallthru
      _
    %1452 = vsyncpa [#allocation8], 1
    %1453 = vsyncpa [#allocation10], 1

</llo_original>
